<compile_context>
chip_gen: v5e
topology: v5e:2x2
jax: 0.10.0
libtpu: 0.0.40
codegen_flags: <defaults>
</compile_context>

<pallas_src>
import functools

import jax
import jax.numpy as jnp
import numpy as np
from jax import lax
from jax.experimental import pallas as pl
from jax.experimental.pallas import tpu as pltpu


_VMEM_LIMIT = 48 * 1024 * 1024  # <= 64 MiB physical VMEM on v7x, safe on v5e/v6e.


def _pick_tile(n, max_tile, align):
    """Largest divisor of n that is a multiple of `align` and <= max_tile, else n."""
    best = None
    t = align
    while t <= max_tile:
        if n % t == 0:
            best = t
        t += align
    return best if best is not None else n


# ----------------------------- tiled matmul + bias -----------------------------

def _matmul_bias_kernel(x_ref, w_ref, b_ref, o_ref, acc_ref):
    k = pl.program_id(1)
    nk = pl.num_programs(1)

    @pl.when(k == 0)
    def _():
        acc_ref[...] = jnp.zeros_like(acc_ref)

    acc_ref[...] += jnp.dot(x_ref[...], w_ref[...],
                            preferred_element_type=jnp.float32)

    @pl.when(k == nk - 1)
    def _():
        # Bias added once, on the final K tile only.
        o_ref[...] = (acc_ref[...] + b_ref[...]).astype(o_ref.dtype)


def matmul_bias(x2d, w, b, *, tm_max=512, tk_max=2048):
    """x2d: (M, K), w: (K, N), b: (N,) -> (M, N) f32, tiled/pipelined on the MXU."""
    M, K = x2d.shape
    _, N = w.shape
    tm = _pick_tile(M, tm_max, 8)
    tk = K if K <= tk_max else _pick_tile(K, tk_max, 128)
    nm, nk = M // tm, K // tk
    b2d = b.reshape(1, N).astype(jnp.float32)
    return pl.pallas_call(
        _matmul_bias_kernel,
        out_shape=jax.ShapeDtypeStruct((M, N), jnp.float32),
        grid=(nm, nk),
        in_specs=[
            pl.BlockSpec((tm, tk), lambda i, k: (i, k)),
            pl.BlockSpec((tk, N), lambda i, k: (k, 0)),
            pl.BlockSpec((1, N), lambda i, k: (0, 0)),
        ],
        out_specs=pl.BlockSpec((tm, N), lambda i, k: (i, 0)),
        scratch_shapes=[pltpu.VMEM((tm, N), jnp.float32)],
        compiler_params=pltpu.CompilerParams(
            dimension_semantics=("parallel", "arbitrary"),
            vmem_limit_bytes=_VMEM_LIMIT),
    )(x2d, w, b2d)


def conv1x1(x_nhwc, w, b):
    """NHWC 1x1 conv + bias. w: (Cin, Cout)."""
    B, H, W, Cin = x_nhwc.shape
    y = matmul_bias(x_nhwc.reshape(B * H * W, Cin).astype(jnp.bfloat16),
                    w.astype(jnp.bfloat16), b)
    return y.reshape(B, H, W, -1)


# ----------------------- fused 1x1 conv + MaxPool2d kernel ----------------------

def _conv1x1_pool_kernel(x_ref, w_ref, b_ref, o_ref, ypad_ref, hmax_ref, *,
                         H, W, P, K, S, Ho, Wo):
    Cout = w_ref.shape[-1]
    Hp, Wp = H + 2 * P, W + 2 * P

    # 1x1 conv: (H*W, Cin) @ (Cin, Cout) + bias (bf16 MXU inputs, f32 accumulate).
    y = jnp.dot(x_ref[...], w_ref[...],
                preferred_element_type=jnp.float32) + b_ref[...]

    # Scatter conv rows into the -inf padded pooling scratch (kept in VMEM).
    ypad_ref[...] = jnp.full((Hp, Wp, Cout), -jnp.inf, dtype=jnp.float32)
    for h in range(H):
        ypad_ref[P + h, P:P + W, :] = y[h * W:(h + 1) * W, :]

    # Pool along H: per output row, max of K full (Wp, Cout) rows.
    for ho in range(Ho):
        hs = ho * S
        r = ypad_ref[hs, :, :]
        for kh in range(1, K):
            r = jnp.maximum(r, ypad_ref[hs + kh, :, :])
        hmax_ref[ho, :, :] = r

    # Pool along W: per output column, max of K full (Ho, Cout) slabs.
    for wo in range(Wo):
        ws = wo * S
        m = hmax_ref[:, ws, :]
        for kw in range(1, K):
            m = jnp.maximum(m, hmax_ref[:, ws + kw, :])
        o_ref[:, wo, :] = m


def conv1x1_maxpool(x_nhwc, w, b, *, kernel, stride, padding):
    """Fused NHWC 1x1 conv + bias + MaxPool2d(kernel, stride, padding), floor mode."""
    B, H, W, Cin = x_nhwc.shape
    Cout = w.shape[-1]
    K, S, P = kernel, stride, padding
    Ho = (H + 2 * P - K) // S + 1
    Wo = (W + 2 * P - K) // S + 1
    x2d = x_nhwc.reshape(B, H * W, Cin).astype(jnp.bfloat16)
    kfn = functools.partial(_conv1x1_pool_kernel,
                            H=H, W=W, P=P, K=K, S=S, Ho=Ho, Wo=Wo)
    # TODO(synk): halo-tile H inside this kernel for very large feature maps
    # (currently the full per-batch activation resides in VMEM).
    return pl.pallas_call(
        kfn,
        out_shape=jax.ShapeDtypeStruct((B, Ho, Wo, Cout), jnp.float32),
        grid=(B,),
        in_specs=[
            pl.BlockSpec((None, H * W, Cin), lambda bi: (bi, 0, 0)),
            pl.BlockSpec((Cin, Cout), lambda bi: (0, 0)),
            pl.BlockSpec((1, Cout), lambda bi: (0, 0)),
        ],
        out_specs=pl.BlockSpec((None, Ho, Wo, Cout), lambda bi: (bi, 0, 0, 0)),
        scratch_shapes=[
            pltpu.VMEM((H + 2 * P, W + 2 * P, Cout), jnp.float32),
            pltpu.VMEM((Ho, W + 2 * P, Cout), jnp.float32),
        ],
        compiler_params=pltpu.CompilerParams(
            dimension_semantics=("parallel",),
            vmem_limit_bytes=_VMEM_LIMIT),
    )(x2d, w.astype(jnp.bfloat16), b.reshape(1, Cout).astype(jnp.float32))


# ------------------ 3x3 conv as implicit GEMM (no im2col in HBM) ----------------

def _conv3x3_kernel(x_ref, w_ref, b_ref, o_ref, *, Wp, tm):
    m = pl.program_id(1)
    row0 = m * tm
    acc = jnp.zeros((tm, w_ref.shape[-1]), jnp.float32)
    for kh in range(3):
        for kw in range(3):
            t = kh * 3 + kw
            xs = x_ref[pl.ds(row0 + kh * Wp + kw, tm), :]
            acc += jnp.dot(xs, w_ref[t], preferred_element_type=jnp.float32)
    o_ref[...] = (acc + b_ref[...]).astype(o_ref.dtype)


def conv3x3_same(x_nhwc, w_hwio, b):
    """NHWC 3x3 conv, stride 1, padding 1, + bias. w_hwio: (3, 3, Cin, Cout).

    The zero-padded image is flattened over (H+2, W+2); each 3x3 tap then becomes
    a constant row offset, so the conv is 9 shifted (tm,Cin)@(Cin,Cout) MXU dots
    accumulated in-register.  Output rows at padded-column positions are computed
    (finite garbage) and discarded by the wrapper slice.
    """
    B, H, W, Cin = x_nhwc.shape
    Cout = w_hwio.shape[-1]
    Hp, Wp = H + 2, W + 2
    xpad = jnp.pad(x_nhwc.astype(jnp.bfloat16), ((0, 0), (1, 1), (1, 1), (0, 0)))
    # One extra zero row at each end keeps every tap of every computed row in bounds.
    xflat = jnp.pad(xpad.reshape(B, Hp * Wp, Cin), ((0, 0), (1, 1), (0, 0)))
    w9 = w_hwio.astype(jnp.bfloat16).reshape(9, Cin, Cout)

    Mout = H * Wp
    tm = _pick_tile(Mout, 512, 8)
    nm = Mout // tm
    kfn = functools.partial(_conv3x3_kernel, Wp=Wp, tm=tm)
    out_full = pl.pallas_call(
        kfn,
        out_shape=jax.ShapeDtypeStruct((B, Mout, Cout), jnp.float32),
        grid=(B, nm),
        in_specs=[
            pl.BlockSpec((None, Hp * Wp + 2, Cin), lambda bi, mi: (bi, 0, 0)),
            pl.BlockSpec((9, Cin, Cout), lambda bi, mi: (0, 0, 0)),
            pl.BlockSpec((1, Cout), lambda bi, mi: (0, 0)),
        ],
        out_specs=pl.BlockSpec((None, tm, Cout), lambda bi, mi: (bi, mi, 0)),
        compiler_params=pltpu.CompilerParams(
            dimension_semantics=("parallel", "parallel"),
            vmem_limit_bytes=_VMEM_LIMIT),
    )(xflat, w9, b.reshape(1, Cout).astype(jnp.float32))
    # Valid outputs live in the interior columns of the width-padded grid.
    return out_full.reshape(B, H, Wp, Cout)[:, :, 1:1 + W, :]


# ------------------------------ FeatureFusionNetwork ----------------------------

class FeatureFusionNetworkPallas:
    def __init__(self, in_channels, out_channels, feature_fusion_arch_str, key):
        self.in_channels = list(in_channels)
        self.out_channels = out_channels
        self.feature_fusion_arch_str = feature_fusion_arch_str
        self.arch = self._decode_ffm_arch()

        num_levels = len(self.in_channels)
        keys = jax.random.split(key, 4 * num_levels)
        self.lat_w, self.lat_b, self.fpn_w, self.fpn_b = [], [], [], []
        for i in range(num_levels):
            # lateral ConvPack: 1x1 conv, bias=True (norm_cfg=None), no activation
            self.lat_w.append(
                0.1 * jax.random.normal(keys[4 * i], (self.in_channels[i], out_channels), jnp.float32))
            self.lat_b.append(
                0.1 * jax.random.normal(keys[4 * i + 1], (out_channels,), jnp.float32))
            # fpn ConvPack: 3x3 conv (2C -> 2C), padding 1, bias=True, no activation
            self.fpn_w.append(
                0.1 * jax.random.normal(keys[4 * i + 2], (3, 3, 2 * out_channels, 2 * out_channels), jnp.float32))
            self.fpn_b.append(
                0.1 * jax.random.normal(keys[4 * i + 3], (2 * out_channels,), jnp.float32))

    def _decode_ffm_arch(self):
        arch, block = [], []
        for ch in self.feature_fusion_arch_str:
            if ch == '-':
                arch.append(block)
                block = []
            else:
                block.append(int(ch))
        arch.append(block)
        return arch

    def __call__(self, inputs_nchw):
        # NCHW -> NHWC once at the boundary.
        inputs = [jnp.transpose(x, (0, 2, 3, 1)) for x in inputs_nchw]
        build_out = []
        for i, block in enumerate(self.arch):
            i1, i2 = block[0], block[1]
            laterals = []
            for idx in (i1, i2):
                if idx == 0:
                    y = conv1x1_maxpool(inputs[idx], self.lat_w[idx], self.lat_b[idx],
                                        kernel=5, stride=4, padding=1)   # c24_maxpool
                elif idx == 1:
                    y = conv1x1_maxpool(inputs[idx], self.lat_w[idx], self.lat_b[idx],
                                        kernel=3, stride=2, padding=1)   # c34_maxpool
                else:
                    y = conv1x1(inputs[idx], self.lat_w[idx], self.lat_b[idx])
                laterals.append(y)
            # TODO(synk): write laterals / fpn outputs straight into the concat
            # buffer via out_specs channel offsets + input_output_aliases instead
            # of jnp.concatenate (small pooled tensors, kept as XLA glue here).
            cat = jnp.concatenate(laterals, axis=-1)
            build_out.append(conv3x3_same(cat, self.fpn_w[i], self.fpn_b[i]))
        outs = jnp.concatenate([inputs[2], build_out[0], build_out[1]], axis=-1)
        # NHWC -> NCHW (PyTorch output convention)
        return jnp.transpose(outs, (0, 3, 1, 2))


# ------------------------------ pure-JAX reference -------------------------------

def ref_forward(inputs_nchw, net):
    inputs = [jnp.transpose(x, (0, 2, 3, 1)) for x in inputs_nchw]

    def conv(x, w_hwio, b, pad):
        return lax.conv_general_dilated(
            x, w_hwio, window_strides=(1, 1), padding=[(pad, pad)] * 2,
            dimension_numbers=('NHWC', 'HWIO', 'NHWC')) + b

    def pool(x, k, s, p):
        return lax.reduce_window(
            x, -jnp.inf, lax.max, (1, k, k, 1), (1, s, s, 1),
            [(0, 0), (p, p), (p, p), (0, 0)])

    build_out = []
    for i, block in enumerate(net.arch):
        i1, i2 = block[0], block[1]
        lats = []
        for idx in (i1, i2):
            w = net.lat_w[idx].reshape(1, 1, *net.lat_w[idx].shape)
            y = conv(inputs[idx], w, net.lat_b[idx], 0)
            if idx == 0:
                y = pool(y, 5, 4, 1)
            elif idx == 1:
                y = pool(y, 3, 2, 1)
            lats.append(y)
        cat = jnp.concatenate(lats, axis=-1)
        build_out.append(conv(cat, net.fpn_w[i], net.fpn_b[i], 1))
    outs = jnp.concatenate([inputs[2], build_out[0], build_out[1]], axis=-1)
    return jnp.transpose(outs, (0, 3, 1, 2))


# ----------------------------------- main ----------------------------------------

if __name__ == "__main__":
    key = jax.random.PRNGKey(0)
    k_in, k_param = jax.random.split(key)

    # Small FPN-style pyramid: level strides 1x/2x/4x.
    in_channels = [4, 8, 16]
    out_channels = 8
    B = 2
    spatial = [16, 8, 4]

    ks = jax.random.split(k_in, 3)
    inputs = [
        jax.random.normal(ks[i], (B, in_channels[i], spatial[i], spatial[i]), jnp.float32)
        for i in range(3)
    ]

    net = FeatureFusionNetworkPallas(
        in_channels=in_channels,
        out_channels=out_channels,
        feature_fusion_arch_str="01-12",   # blocks: [0,1] and [1,2]
        key=k_param,
    )

    out = net(inputs)
    out = jax.block_until_ready(out)

    expected_shape = (B, in_channels[2] + 4 * out_channels, spatial[2], spatial[2])
    assert out.shape == expected_shape, (out.shape, expected_shape)

    ref = jax.block_until_ready(ref_forward(inputs, net))
    np.testing.assert_allclose(np.asarray(out), np.asarray(ref), rtol=5e-2, atol=5e-2)

    print("KERNEL_OK")
</pallas_src>

<mosaic_0001>
module attributes {stable_mosaic.version = 11 : i64} {
  func.func @_conv1x1_pool_kernel(%arg0: i32, %arg1: memref<1x256x4xbf16, #tpu.memory_space<vmem>>, %arg2: memref<4x8xbf16, #tpu.memory_space<vmem>>, %arg3: memref<1x8xf32, #tpu.memory_space<vmem>>, %arg4: memref<1x4x4x8xf32, #tpu.memory_space<vmem>>, %arg5: memref<18x18x8xf32, #tpu.memory_space<vmem>>, %arg6: memref<4x18x8xf32, #tpu.memory_space<vmem>>) attributes {dimension_semantics = [#tpu.dimension_semantics<parallel>], iteration_bounds = array<i64: 2>, scalar_prefetch = 0 : i64, scratch_operands = 2 : i64, tpu.core_type = #tpu.core_type<tc>, window_params = [{transform_indices = @transform_0, window_bounds = array<i64: 1, 256, 4>}, {pipeline_mode = #tpu.pipeline_mode<synchronous>, transform_indices = @transform_1, window_bounds = array<i64: 4, 8>}, {pipeline_mode = #tpu.pipeline_mode<synchronous>, transform_indices = @transform_2, window_bounds = array<i64: 1, 8>}, {transform_indices = @transform_3, window_bounds = array<i64: 1, 4, 4, 8>}]} {
    %c0 = arith.constant 0 : index
    %c0_0 = arith.constant 0 : index
    %c0_1 = arith.constant 0 : index
    %0 = vector.load %arg1[%c0, %c0_0, %c0_1] : memref<1x256x4xbf16, #tpu.memory_space<vmem>>, vector<1x256x4xbf16>
    %1 = vector.shape_cast %0 : vector<1x256x4xbf16> to vector<256x4xbf16>
    %c0_2 = arith.constant 0 : index
    %c0_3 = arith.constant 0 : index
    %2 = vector.load %arg2[%c0_2, %c0_3] : memref<4x8xbf16, #tpu.memory_space<vmem>>, vector<4x8xbf16>
    %cst = arith.constant dense<0.000000e+00> : vector<256x8xf32>
    %3 = tpu.matmul %1, %2, %cst {dimension_numbers = #tpu.dot_dimension_numbers<[1], [0], [0], [1], [0, 0, 1, 1], [], []>} : vector<256x4xbf16>, vector<4x8xbf16>, vector<256x8xf32> -> vector<256x8xf32>
    %c0_4 = arith.constant 0 : index
    %c0_5 = arith.constant 0 : index
    %4 = vector.load %arg3[%c0_4, %c0_5] : memref<1x8xf32, #tpu.memory_space<vmem>>, vector<1x8xf32>
    %5 = vector.broadcast %4 : vector<1x8xf32> to vector<256x8xf32>
    %6 = arith.addf %3, %5 : vector<256x8xf32>
    %cst_6 = arith.constant 0xFF800000 : f32
    %7 = vector.broadcast %cst_6 : f32 to vector<18x18x8xf32>
    %c0_7 = arith.constant 0 : index
    %c0_8 = arith.constant 0 : index
    %c0_9 = arith.constant 0 : index
    %8 = vector.load %arg5[%c0_7, %c0_8, %c0_9] : memref<18x18x8xf32, #tpu.memory_space<vmem>>, vector<18x18x8xf32>
    tpu.vector_store %arg5[%c0_7, %c0_8, %c0_9], %7 {strides = array<i32>} : memref<18x18x8xf32, #tpu.memory_space<vmem>>, vector<18x18x8xf32>,
    %9 = vector.extract_strided_slice %6 {offsets = [0, 0], sizes = [16, 8], strides = [1, 1]} : vector<256x8xf32> to vector<16x8xf32>
    %c1 = arith.constant 1 : index
    %c1_10 = arith.constant 1 : index
    %c0_11 = arith.constant 0 : index
    %10 = vector.load %arg5[%c1, %c1_10, %c0_11] : memref<18x18x8xf32, #tpu.memory_space<vmem>>, vector<1x16x8xf32>
    %11 = vector.shape_cast %10 : vector<1x16x8xf32> to vector<16x8xf32>
    %12 = vector.shape_cast %9 : vector<16x8xf32> to vector<1x16x8xf32>
    tpu.vector_store %arg5[%c1, %c1_10, %c0_11], %12 {strides = array<i32>} : memref<18x18x8xf32, #tpu.memory_space<vmem>>, vector<1x16x8xf32>,
    %13 = vector.extract_strided_slice %6 {offsets = [16, 0], sizes = [16, 8], strides = [1, 1]} : vector<256x8xf32> to vector<16x8xf32>
    %c2 = arith.constant 2 : index
    %c1_12 = arith.constant 1 : index
    %c0_13 = arith.constant 0 : index
    %14 = vector.load %arg5[%c2, %c1_12, %c0_13] : memref<18x18x8xf32, #tpu.memory_space<vmem>>, vector<1x16x8xf32>
    %15 = vector.shape_cast %14 : vector<1x16x8xf32> to vector<16x8xf32>
    %16 = vector.shape_cast %13 : vector<16x8xf32> to vector<1x16x8xf32>
    tpu.vector_store %arg5[%c2, %c1_12, %c0_13], %16 {strides = array<i32>} : memref<18x18x8xf32, #tpu.memory_space<vmem>>, vector<1x16x8xf32>,
    %17 = vector.extract_strided_slice %6 {offsets = [32, 0], sizes = [16, 8], strides = [1, 1]} : vector<256x8xf32> to vector<16x8xf32>
    %c3 = arith.constant 3 : index
    %c1_14 = arith.constant 1 : index
    %c0_15 = arith.constant 0 : index
    %18 = vector.load %arg5[%c3, %c1_14, %c0_15] : memref<18x18x8xf32, #tpu.memory_space<vmem>>, vector<1x16x8xf32>
    %19 = vector.shape_cast %18 : vector<1x16x8xf32> to vector<16x8xf32>
    %20 = vector.shape_cast %17 : vector<16x8xf32> to vector<1x16x8xf32>
    tpu.vector_store %arg5[%c3, %c1_14, %c0_15], %20 {strides = array<i32>} : memref<18x18x8xf32, #tpu.memory_space<vmem>>, vector<1x16x8xf32>,
    %21 = vector.extract_strided_slice %6 {offsets = [48, 0], sizes = [16, 8], strides = [1, 1]} : vector<256x8xf32> to vector<16x8xf32>
    %c4 = arith.constant 4 : index
    %c1_16 = arith.constant 1 : index
    %c0_17 = arith.constant 0 : index
    %22 = vector.load %arg5[%c4, %c1_16, %c0_17] : memref<18x18x8xf32, #tpu.memory_space<vmem>>, vector<1x16x8xf32>
    %23 = vector.shape_cast %22 : vector<1x16x8xf32> to vector<16x8xf32>
    %24 = vector.shape_cast %21 : vector<16x8xf32> to vector<1x16x8xf32>
    tpu.vector_store %arg5[%c4, %c1_16, %c0_17], %24 {strides = array<i32>} : memref<18x18x8xf32, #tpu.memory_space<vmem>>, vector<1x16x8xf32>,
    %25 = vector.extract_strided_slice %6 {offsets = [64, 0], sizes = [16, 8], strides = [1, 1]} : vector<256x8xf32> to vector<16x8xf32>
    %c5 = arith.constant 5 : index
    %c1_18 = arith.constant 1 : index
    %c0_19 = arith.constant 0 : index
    %26 = vector.load %arg5[%c5, %c1_18, %c0_19] : memref<18x18x8xf32, #tpu.memory_space<vmem>>, vector<1x16x8xf32>
    %27 = vector.shape_cast %26 : vector<1x16x8xf32> to vector<16x8xf32>
    %28 = vector.shape_cast %25 : vector<16x8xf32> to vector<1x16x8xf32>
    tpu.vector_store %arg5[%c5, %c1_18, %c0_19], %28 {strides = array<i32>} : memref<18x18x8xf32, #tpu.memory_space<vmem>>, vector<1x16x8xf32>,
    %29 = vector.extract_strided_slice %6 {offsets = [80, 0], sizes = [16, 8], strides = [1, 1]} : vector<256x8xf32> to vector<16x8xf32>
    %c6 = arith.constant 6 : index
    %c1_20 = arith.constant 1 : index
    %c0_21 = arith.constant 0 : index
    %30 = vector.load %arg5[%c6, %c1_20, %c0_21] : memref<18x18x8xf32, #tpu.memory_space<vmem>>, vector<1x16x8xf32>
    %31 = vector.shape_cast %30 : vector<1x16x8xf32> to vector<16x8xf32>
    %32 = vector.shape_cast %29 : vector<16x8xf32> to vector<1x16x8xf32>
    tpu.vector_store %arg5[%c6, %c1_20, %c0_21], %32 {strides = array<i32>} : memref<18x18x8xf32, #tpu.memory_space<vmem>>, vector<1x16x8xf32>,
    %33 = vector.extract_strided_slice %6 {offsets = [96, 0], sizes = [16, 8], strides = [1, 1]} : vector<256x8xf32> to vector<16x8xf32>
    %c7 = arith.constant 7 : index
    %c1_22 = arith.constant 1 : index
    %c0_23 = arith.constant 0 : index
    %34 = vector.load %arg5[%c7, %c1_22, %c0_23] : memref<18x18x8xf32, #tpu.memory_space<vmem>>, vector<1x16x8xf32>
    %35 = vector.shape_cast %34 : vector<1x16x8xf32> to vector<16x8xf32>
    %36 = vector.shape_cast %33 : vector<16x8xf32> to vector<1x16x8xf32>
    tpu.vector_store %arg5[%c7, %c1_22, %c0_23], %36 {strides = array<i32>} : memref<18x18x8xf32, #tpu.memory_space<vmem>>, vector<1x16x8xf32>,
    %37 = vector.extract_strided_slice %6 {offsets = [112, 0], sizes = [16, 8], strides = [1, 1]} : vector<256x8xf32> to vector<16x8xf32>
    %c8 = arith.constant 8 : index
    %c1_24 = arith.constant 1 : index
    %c0_25 = arith.constant 0 : index
    %38 = vector.load %arg5[%c8, %c1_24, %c0_25] : memref<18x18x8xf32, #tpu.memory_space<vmem>>, vector<1x16x8xf32>
    %39 = vector.shape_cast %38 : vector<1x16x8xf32> to vector<16x8xf32>
    %40 = vector.shape_cast %37 : vector<16x8xf32> to vector<1x16x8xf32>
    tpu.vector_store %arg5[%c8, %c1_24, %c0_25], %40 {strides = array<i32>} : memref<18x18x8xf32, #tpu.memory_space<vmem>>, vector<1x16x8xf32>,
    %41 = vector.extract_strided_slice %6 {offsets = [128, 0], sizes = [16, 8], strides = [1, 1]} : vector<256x8xf32> to vector<16x8xf32>
    %c9 = arith.constant 9 : index
    %c1_26 = arith.constant 1 : index
    %c0_27 = arith.constant 0 : index
    %42 = vector.load %arg5[%c9, %c1_26, %c0_27] : memref<18x18x8xf32, #tpu.memory_space<vmem>>, vector<1x16x8xf32>
    %43 = vector.shape_cast %42 : vector<1x16x8xf32> to vector<16x8xf32>
    %44 = vector.shape_cast %41 : vector<16x8xf32> to vector<1x16x8xf32>
    tpu.vector_store %arg5[%c9, %c1_26, %c0_27], %44 {strides = array<i32>} : memref<18x18x8xf32, #tpu.memory_space<vmem>>, vector<1x16x8xf32>,
    %45 = vector.extract_strided_slice %6 {offsets = [144, 0], sizes = [16, 8], strides = [1, 1]} : vector<256x8xf32> to vector<16x8xf32>
    %c10 = arith.constant 10 : index
    %c1_28 = arith.constant 1 : index
    %c0_29 = arith.constant 0 : index
    %46 = vector.load %arg5[%c10, %c1_28, %c0_29] : memref<18x18x8xf32, #tpu.memory_space<vmem>>, vector<1x16x8xf32>
    %47 = vector.shape_cast %46 : vector<1x16x8xf32> to vector<16x8xf32>
    %48 = vector.shape_cast %45 : vector<16x8xf32> to vector<1x16x8xf32>
    tpu.vector_store %arg5[%c10, %c1_28, %c0_29], %48 {strides = array<i32>} : memref<18x18x8xf32, #tpu.memory_space<vmem>>, vector<1x16x8xf32>,
    %49 = vector.extract_strided_slice %6 {offsets = [160, 0], sizes = [16, 8], strides = [1, 1]} : vector<256x8xf32> to vector<16x8xf32>
    %c11 = arith.constant 11 : index
    %c1_30 = arith.constant 1 : index
    %c0_31 = arith.constant 0 : index
    %50 = vector.load %arg5[%c11, %c1_30, %c0_31] : memref<18x18x8xf32, #tpu.memory_space<vmem>>, vector<1x16x8xf32>
    %51 = vector.shape_cast %50 : vector<1x16x8xf32> to vector<16x8xf32>
    %52 = vector.shape_cast %49 : vector<16x8xf32> to vector<1x16x8xf32>
    tpu.vector_store %arg5[%c11, %c1_30, %c0_31], %52 {strides = array<i32>} : memref<18x18x8xf32, #tpu.memory_space<vmem>>, vector<1x16x8xf32>,
    %53 = vector.extract_strided_slice %6 {offsets = [176, 0], sizes = [16, 8], strides = [1, 1]} : vector<256x8xf32> to vector<16x8xf32>
    %c12 = arith.constant 12 : index
    %c1_32 = arith.constant 1 : index
    %c0_33 = arith.constant 0 : index
    %54 = vector.load %arg5[%c12, %c1_32, %c0_33] : memref<18x18x8xf32, #tpu.memory_space<vmem>>, vector<1x16x8xf32>
    %55 = vector.shape_cast %54 : vector<1x16x8xf32> to vector<16x8xf32>
    %56 = vector.shape_cast %53 : vector<16x8xf32> to vector<1x16x8xf32>
    tpu.vector_store %arg5[%c12, %c1_32, %c0_33], %56 {strides = array<i32>} : memref<18x18x8xf32, #tpu.memory_space<vmem>>, vector<1x16x8xf32>,
    %57 = vector.extract_strided_slice %6 {offsets = [192, 0], sizes = [16, 8], strides = [1, 1]} : vector<256x8xf32> to vector<16x8xf32>
    %c13 = arith.constant 13 : index
    %c1_34 = arith.constant 1 : index
    %c0_35 = arith.constant 0 : index
    %58 = vector.load %arg5[%c13, %c1_34, %c0_35] : memref<18x18x8xf32, #tpu.memory_space<vmem>>, vector<1x16x8xf32>
    %59 = vector.shape_cast %58 : vector<1x16x8xf32> to vector<16x8xf32>
    %60 = vector.shape_cast %57 : vector<16x8xf32> to vector<1x16x8xf32>
    tpu.vector_store %arg5[%c13, %c1_34, %c0_35], %60 {strides = array<i32>} : memref<18x18x8xf32, #tpu.memory_space<vmem>>, vector<1x16x8xf32>,
    %61 = vector.extract_strided_slice %6 {offsets = [208, 0], sizes = [16, 8], strides = [1, 1]} : vector<256x8xf32> to vector<16x8xf32>
    %c14 = arith.constant 14 : index
    %c1_36 = arith.constant 1 : index
    %c0_37 = arith.constant 0 : index
    %62 = vector.load %arg5[%c14, %c1_36, %c0_37] : memref<18x18x8xf32, #tpu.memory_space<vmem>>, vector<1x16x8xf32>
    %63 = vector.shape_cast %62 : vector<1x16x8xf32> to vector<16x8xf32>
    %64 = vector.shape_cast %61 : vector<16x8xf32> to vector<1x16x8xf32>
    tpu.vector_store %arg5[%c14, %c1_36, %c0_37], %64 {strides = array<i32>} : memref<18x18x8xf32, #tpu.memory_space<vmem>>, vector<1x16x8xf32>,
    %65 = vector.extract_strided_slice %6 {offsets = [224, 0], sizes = [16, 8], strides = [1, 1]} : vector<256x8xf32> to vector<16x8xf32>
    %c15 = arith.constant 15 : index
    %c1_38 = arith.constant 1 : index
    %c0_39 = arith.constant 0 : index
    %66 = vector.load %arg5[%c15, %c1_38, %c0_39] : memref<18x18x8xf32, #tpu.memory_space<vmem>>, vector<1x16x8xf32>
    %67 = vector.shape_cast %66 : vector<1x16x8xf32> to vector<16x8xf32>
    %68 = vector.shape_cast %65 : vector<16x8xf32> to vector<1x16x8xf32>
    tpu.vector_store %arg5[%c15, %c1_38, %c0_39], %68 {strides = array<i32>} : memref<18x18x8xf32, #tpu.memory_space<vmem>>, vector<1x16x8xf32>,
    %69 = vector.extract_strided_slice %6 {offsets = [240, 0], sizes = [16, 8], strides = [1, 1]} : vector<256x8xf32> to vector<16x8xf32>
    %c16 = arith.constant 16 : index
    %c1_40 = arith.constant 1 : index
    %c0_41 = arith.constant 0 : index
    %70 = vector.load %arg5[%c16, %c1_40, %c0_41] : memref<18x18x8xf32, #tpu.memory_space<vmem>>, vector<1x16x8xf32>
    %71 = vector.shape_cast %70 : vector<1x16x8xf32> to vector<16x8xf32>
    %72 = vector.shape_cast %69 : vector<16x8xf32> to vector<1x16x8xf32>
    tpu.vector_store %arg5[%c16, %c1_40, %c0_41], %72 {strides = array<i32>} : memref<18x18x8xf32, #tpu.memory_space<vmem>>, vector<1x16x8xf32>,
    %c0_42 = arith.constant 0 : index
    %c0_43 = arith.constant 0 : index
    %c0_44 = arith.constant 0 : index
    %73 = vector.load %arg5[%c0_42, %c0_43, %c0_44] : memref<18x18x8xf32, #tpu.memory_space<vmem>>, vector<1x18x8xf32>
    %74 = vector.shape_cast %73 : vector<1x18x8xf32> to vector<18x8xf32>
    %c1_45 = arith.constant 1 : index
    %c0_46 = arith.constant 0 : index
    %c0_47 = arith.constant 0 : index
    %75 = vector.load %arg5[%c1_45, %c0_46, %c0_47] : memref<18x18x8xf32, #tpu.memory_space<vmem>>, vector<1x18x8xf32>
    %76 = vector.shape_cast %75 : vector<1x18x8xf32> to vector<18x8xf32>
    %77 = arith.maximumf %74, %76 : vector<18x8xf32>
    %c2_48 = arith.constant 2 : index
    %c0_49 = arith.constant 0 : index
    %c0_50 = arith.constant 0 : index
    %78 = vector.load %arg5[%c2_48, %c0_49, %c0_50] : memref<18x18x8xf32, #tpu.memory_space<vmem>>, vector<1x18x8xf32>
    %79 = vector.shape_cast %78 : vector<1x18x8xf32> to vector<18x8xf32>
    %80 = arith.maximumf %77, %79 : vector<18x8xf32>
    %c3_51 = arith.constant 3 : index
    %c0_52 = arith.constant 0 : index
    %c0_53 = arith.constant 0 : index
    %81 = vector.load %arg5[%c3_51, %c0_52, %c0_53] : memref<18x18x8xf32, #tpu.memory_space<vmem>>, vector<1x18x8xf32>
    %82 = vector.shape_cast %81 : vector<1x18x8xf32> to vector<18x8xf32>
    %83 = arith.maximumf %80, %82 : vector<18x8xf32>
    %c4_54 = arith.constant 4 : index
    %c0_55 = arith.constant 0 : index
    %c0_56 = arith.constant 0 : index
    %84 = vector.load %arg5[%c4_54, %c0_55, %c0_56] : memref<18x18x8xf32, #tpu.memory_space<vmem>>, vector<1x18x8xf32>
    %85 = vector.shape_cast %84 : vector<1x18x8xf32> to vector<18x8xf32>
    %86 = arith.maximumf %83, %85 : vector<18x8xf32>
    %c0_57 = arith.constant 0 : index
    %c0_58 = arith.constant 0 : index
    %c0_59 = arith.constant 0 : index
    %87 = vector.load %arg6[%c0_57, %c0_58, %c0_59] : memref<4x18x8xf32, #tpu.memory_space<vmem>>, vector<1x18x8xf32>
    %88 = vector.shape_cast %87 : vector<1x18x8xf32> to vector<18x8xf32>
    %89 = vector.shape_cast %86 : vector<18x8xf32> to vector<1x18x8xf32>
    tpu.vector_store %arg6[%c0_57, %c0_58, %c0_59], %89 {strides = array<i32>} : memref<4x18x8xf32, #tpu.memory_space<vmem>>, vector<1x18x8xf32>,
    %c4_60 = arith.constant 4 : index
    %c0_61 = arith.constant 0 : index
    %c0_62 = arith.constant 0 : index
    %90 = vector.load %arg5[%c4_60, %c0_61, %c0_62] : memref<18x18x8xf32, #tpu.memory_space<vmem>>, vector<1x18x8xf32>
    %91 = vector.shape_cast %90 : vector<1x18x8xf32> to vector<18x8xf32>
    %c5_63 = arith.constant 5 : index
    %c0_64 = arith.constant 0 : index
    %c0_65 = arith.constant 0 : index
    %92 = vector.load %arg5[%c5_63, %c0_64, %c0_65] : memref<18x18x8xf32, #tpu.memory_space<vmem>>, vector<1x18x8xf32>
    %93 = vector.shape_cast %92 : vector<1x18x8xf32> to vector<18x8xf32>
    %94 = arith.maximumf %91, %93 : vector<18x8xf32>
    %c6_66 = arith.constant 6 : index
    %c0_67 = arith.constant 0 : index
    %c0_68 = arith.constant 0 : index
    %95 = vector.load %arg5[%c6_66, %c0_67, %c0_68] : memref<18x18x8xf32, #tpu.memory_space<vmem>>, vector<1x18x8xf32>
    %96 = vector.shape_cast %95 : vector<1x18x8xf32> to vector<18x8xf32>
    %97 = arith.maximumf %94, %96 : vector<18x8xf32>
    %c7_69 = arith.constant 7 : index
    %c0_70 = arith.constant 0 : index
    %c0_71 = arith.constant 0 : index
    %98 = vector.load %arg5[%c7_69, %c0_70, %c0_71] : memref<18x18x8xf32, #tpu.memory_space<vmem>>, vector<1x18x8xf32>
    %99 = vector.shape_cast %98 : vector<1x18x8xf32> to vector<18x8xf32>
    %100 = arith.maximumf %97, %99 : vector<18x8xf32>
    %c8_72 = arith.constant 8 : index
    %c0_73 = arith.constant 0 : index
    %c0_74 = arith.constant 0 : index
    %101 = vector.load %arg5[%c8_72, %c0_73, %c0_74] : memref<18x18x8xf32, #tpu.memory_space<vmem>>, vector<1x18x8xf32>
    %102 = vector.shape_cast %101 : vector<1x18x8xf32> to vector<18x8xf32>
    %103 = arith.maximumf %100, %102 : vector<18x8xf32>
    %c1_75 = arith.constant 1 : index
    %c0_76 = arith.constant 0 : index
    %c0_77 = arith.constant 0 : index
    %104 = vector.load %arg6[%c1_75, %c0_76, %c0_77] : memref<4x18x8xf32, #tpu.memory_space<vmem>>, vector<1x18x8xf32>
    %105 = vector.shape_cast %104 : vector<1x18x8xf32> to vector<18x8xf32>
    %106 = vector.shape_cast %103 : vector<18x8xf32> to vector<1x18x8xf32>
    tpu.vector_store %arg6[%c1_75, %c0_76, %c0_77], %106 {strides = array<i32>} : memref<4x18x8xf32, #tpu.memory_space<vmem>>, vector<1x18x8xf32>,
    %c8_78 = arith.constant 8 : index
    %c0_79 = arith.constant 0 : index
    %c0_80 = arith.constant 0 : index
    %107 = vector.load %arg5[%c8_78, %c0_79, %c0_80] : memref<18x18x8xf32, #tpu.memory_space<vmem>>, vector<1x18x8xf32>
    %108 = vector.shape_cast %107 : vector<1x18x8xf32> to vector<18x8xf32>
    %c9_81 = arith.constant 9 : index
    %c0_82 = arith.constant 0 : index
    %c0_83 = arith.constant 0 : index
    %109 = vector.load %arg5[%c9_81, %c0_82, %c0_83] : memref<18x18x8xf32, #tpu.memory_space<vmem>>, vector<1x18x8xf32>
    %110 = vector.shape_cast %109 : vector<1x18x8xf32> to vector<18x8xf32>
    %111 = arith.maximumf %108, %110 : vector<18x8xf32>
    %c10_84 = arith.constant 10 : index
    %c0_85 = arith.constant 0 : index
    %c0_86 = arith.constant 0 : index
    %112 = vector.load %arg5[%c10_84, %c0_85, %c0_86] : memref<18x18x8xf32, #tpu.memory_space<vmem>>, vector<1x18x8xf32>
    %113 = vector.shape_cast %112 : vector<1x18x8xf32> to vector<18x8xf32>
    %114 = arith.maximumf %111, %113 : vector<18x8xf32>
    %c11_87 = arith.constant 11 : index
    %c0_88 = arith.constant 0 : index
    %c0_89 = arith.constant 0 : index
    %115 = vector.load %arg5[%c11_87, %c0_88, %c0_89] : memref<18x18x8xf32, #tpu.memory_space<vmem>>, vector<1x18x8xf32>
    %116 = vector.shape_cast %115 : vector<1x18x8xf32> to vector<18x8xf32>
    %117 = arith.maximumf %114, %116 : vector<18x8xf32>
    %c12_90 = arith.constant 12 : index
    %c0_91 = arith.constant 0 : index
    %c0_92 = arith.constant 0 : index
    %118 = vector.load %arg5[%c12_90, %c0_91, %c0_92] : memref<18x18x8xf32, #tpu.memory_space<vmem>>, vector<1x18x8xf32>
    %119 = vector.shape_cast %118 : vector<1x18x8xf32> to vector<18x8xf32>
    %120 = arith.maximumf %117, %119 : vector<18x8xf32>
    %c2_93 = arith.constant 2 : index
    %c0_94 = arith.constant 0 : index
    %c0_95 = arith.constant 0 : index
    %121 = vector.load %arg6[%c2_93, %c0_94, %c0_95] : memref<4x18x8xf32, #tpu.memory_space<vmem>>, vector<1x18x8xf32>
    %122 = vector.shape_cast %121 : vector<1x18x8xf32> to vector<18x8xf32>
    %123 = vector.shape_cast %120 : vector<18x8xf32> to vector<1x18x8xf32>
    tpu.vector_store %arg6[%c2_93, %c0_94, %c0_95], %123 {strides = array<i32>} : memref<4x18x8xf32, #tpu.memory_space<vmem>>, vector<1x18x8xf32>,
    %c12_96 = arith.constant 12 : index
    %c0_97 = arith.constant 0 : index
    %c0_98 = arith.constant 0 : index
    %124 = vector.load %arg5[%c12_96, %c0_97, %c0_98] : memref<18x18x8xf32, #tpu.memory_space<vmem>>, vector<1x18x8xf32>
    %125 = vector.shape_cast %124 : vector<1x18x8xf32> to vector<18x8xf32>
    %c13_99 = arith.constant 13 : index
    %c0_100 = arith.constant 0 : index
    %c0_101 = arith.constant 0 : index
    %126 = vector.load %arg5[%c13_99, %c0_100, %c0_101] : memref<18x18x8xf32, #tpu.memory_space<vmem>>, vector<1x18x8xf32>
    %127 = vector.shape_cast %126 : vector<1x18x8xf32> to vector<18x8xf32>
    %128 = arith.maximumf %125, %127 : vector<18x8xf32>
    %c14_102 = arith.constant 14 : index
    %c0_103 = arith.constant 0 : index
    %c0_104 = arith.constant 0 : index
    %129 = vector.load %arg5[%c14_102, %c0_103, %c0_104] : memref<18x18x8xf32, #tpu.memory_space<vmem>>, vector<1x18x8xf32>
    %130 = vector.shape_cast %129 : vector<1x18x8xf32> to vector<18x8xf32>
    %131 = arith.maximumf %128, %130 : vector<18x8xf32>
    %c15_105 = arith.constant 15 : index
    %c0_106 = arith.constant 0 : index
    %c0_107 = arith.constant 0 : index
    %132 = vector.load %arg5[%c15_105, %c0_106, %c0_107] : memref<18x18x8xf32, #tpu.memory_space<vmem>>, vector<1x18x8xf32>
    %133 = vector.shape_cast %132 : vector<1x18x8xf32> to vector<18x8xf32>
    %134 = arith.maximumf %131, %133 : vector<18x8xf32>
    %c16_108 = arith.constant 16 : index
    %c0_109 = arith.constant 0 : index
    %c0_110 = arith.constant 0 : index
    %135 = vector.load %arg5[%c16_108, %c0_109, %c0_110] : memref<18x18x8xf32, #tpu.memory_space<vmem>>, vector<1x18x8xf32>
    %136 = vector.shape_cast %135 : vector<1x18x8xf32> to vector<18x8xf32>
    %137 = arith.maximumf %134, %136 : vector<18x8xf32>
    %c3_111 = arith.constant 3 : index
    %c0_112 = arith.constant 0 : index
    %c0_113 = arith.constant 0 : index
    %138 = vector.load %arg6[%c3_111, %c0_112, %c0_113] : memref<4x18x8xf32, #tpu.memory_space<vmem>>, vector<1x18x8xf32>
    %139 = vector.shape_cast %138 : vector<1x18x8xf32> to vector<18x8xf32>
    %140 = vector.shape_cast %137 : vector<18x8xf32> to vector<1x18x8xf32>
    tpu.vector_store %arg6[%c3_111, %c0_112, %c0_113], %140 {strides = array<i32>} : memref<4x18x8xf32, #tpu.memory_space<vmem>>, vector<1x18x8xf32>,
    %c0_114 = arith.constant 0 : index
    %c0_115 = arith.constant 0 : index
    %c0_116 = arith.constant 0 : index
    %141 = vector.load %arg6[%c0_114, %c0_115, %c0_116] : memref<4x18x8xf32, #tpu.memory_space<vmem>>, vector<4x1x8xf32>
    %142 = vector.shape_cast %141 : vector<4x1x8xf32> to vector<4x8xf32>
    %c0_117 = arith.constant 0 : index
    %c1_118 = arith.constant 1 : index
    %c0_119 = arith.constant 0 : index
    %143 = vector.load %arg6[%c0_117, %c1_118, %c0_119] : memref<4x18x8xf32, #tpu.memory_space<vmem>>, vector<4x1x8xf32>
    %144 = vector.shape_cast %143 : vector<4x1x8xf32> to vector<4x8xf32>
    %145 = arith.maximumf %142, %144 : vector<4x8xf32>
    %c0_120 = arith.constant 0 : index
    %c2_121 = arith.constant 2 : index
    %c0_122 = arith.constant 0 : index
    %146 = vector.load %arg6[%c0_120, %c2_121, %c0_122] : memref<4x18x8xf32, #tpu.memory_space<vmem>>, vector<4x1x8xf32>
    %147 = vector.shape_cast %146 : vector<4x1x8xf32> to vector<4x8xf32>
    %148 = arith.maximumf %145, %147 : vector<4x8xf32>
    %c0_123 = arith.constant 0 : index
    %c3_124 = arith.constant 3 : index
    %c0_125 = arith.constant 0 : index
    %149 = vector.load %arg6[%c0_123, %c3_124, %c0_125] : memref<4x18x8xf32, #tpu.memory_space<vmem>>, vector<4x1x8xf32>
    %150 = vector.shape_cast %149 : vector<4x1x8xf32> to vector<4x8xf32>
    %151 = arith.maximumf %148, %150 : vector<4x8xf32>
    %c0_126 = arith.constant 0 : index
    %c4_127 = arith.constant 4 : index
    %c0_128 = arith.constant 0 : index
    %152 = vector.load %arg6[%c0_126, %c4_127, %c0_128] : memref<4x18x8xf32, #tpu.memory_space<vmem>>, vector<4x1x8xf32>
    %153 = vector.shape_cast %152 : vector<4x1x8xf32> to vector<4x8xf32>
    %154 = arith.maximumf %151, %153 : vector<4x8xf32>
    %c0_129 = arith.constant 0 : index
    %c0_130 = arith.constant 0 : index
    %c0_131 = arith.constant 0 : index
    %c0_132 = arith.constant 0 : index
    %155 = vector.load %arg4[%c0_129, %c0_130, %c0_131, %c0_132] : memref<1x4x4x8xf32, #tpu.memory_space<vmem>>, vector<1x4x1x8xf32>
    %156 = vector.shape_cast %155 : vector<1x4x1x8xf32> to vector<4x8xf32>
    %157 = vector.shape_cast %154 : vector<4x8xf32> to vector<1x4x1x8xf32>
    tpu.vector_store %arg4[%c0_129, %c0_130, %c0_131, %c0_132], %157 {strides = array<i32>} : memref<1x4x4x8xf32, #tpu.memory_space<vmem>>, vector<1x4x1x8xf32>,
    %c0_133 = arith.constant 0 : index
    %c4_134 = arith.constant 4 : index
    %c0_135 = arith.constant 0 : index
    %158 = vector.load %arg6[%c0_133, %c4_134, %c0_135] : memref<4x18x8xf32, #tpu.memory_space<vmem>>, vector<4x1x8xf32>
    %159 = vector.shape_cast %158 : vector<4x1x8xf32> to vector<4x8xf32>
    %c0_136 = arith.constant 0 : index
    %c5_137 = arith.constant 5 : index
    %c0_138 = arith.constant 0 : index
    %160 = vector.load %arg6[%c0_136, %c5_137, %c0_138] : memref<4x18x8xf32, #tpu.memory_space<vmem>>, vector<4x1x8xf32>
    %161 = vector.shape_cast %160 : vector<4x1x8xf32> to vector<4x8xf32>
    %162 = arith.maximumf %159, %161 : vector<4x8xf32>
    %c0_139 = arith.constant 0 : index
    %c6_140 = arith.constant 6 : index
    %c0_141 = arith.constant 0 : index
    %163 = vector.load %arg6[%c0_139, %c6_140, %c0_141] : memref<4x18x8xf32, #tpu.memory_space<vmem>>, vector<4x1x8xf32>
    %164 = vector.shape_cast %163 : vector<4x1x8xf32> to vector<4x8xf32>
    %165 = arith.maximumf %162, %164 : vector<4x8xf32>
    %c0_142 = arith.constant 0 : index
    %c7_143 = arith.constant 7 : index
    %c0_144 = arith.constant 0 : index
    %166 = vector.load %arg6[%c0_142, %c7_143, %c0_144] : memref<4x18x8xf32, #tpu.memory_space<vmem>>, vector<4x1x8xf32>
    %167 = vector.shape_cast %166 : vector<4x1x8xf32> to vector<4x8xf32>
    %168 = arith.maximumf %165, %167 : vector<4x8xf32>
    %c0_145 = arith.constant 0 : index
    %c8_146 = arith.constant 8 : index
    %c0_147 = arith.constant 0 : index
    %169 = vector.load %arg6[%c0_145, %c8_146, %c0_147] : memref<4x18x8xf32, #tpu.memory_space<vmem>>, vector<4x1x8xf32>
    %170 = vector.shape_cast %169 : vector<4x1x8xf32> to vector<4x8xf32>
    %171 = arith.maximumf %168, %170 : vector<4x8xf32>
    %c0_148 = arith.constant 0 : index
    %c0_149 = arith.constant 0 : index
    %c1_150 = arith.constant 1 : index
    %c0_151 = arith.constant 0 : index
    %172 = vector.load %arg4[%c0_148, %c0_149, %c1_150, %c0_151] : memref<1x4x4x8xf32, #tpu.memory_space<vmem>>, vector<1x4x1x8xf32>
    %173 = vector.shape_cast %172 : vector<1x4x1x8xf32> to vector<4x8xf32>
    %174 = vector.shape_cast %171 : vector<4x8xf32> to vector<1x4x1x8xf32>
    tpu.vector_store %arg4[%c0_148, %c0_149, %c1_150, %c0_151], %174 {strides = array<i32>} : memref<1x4x4x8xf32, #tpu.memory_space<vmem>>, vector<1x4x1x8xf32>,
    %c0_152 = arith.constant 0 : index
    %c8_153 = arith.constant 8 : index
    %c0_154 = arith.constant 0 : index
    %175 = vector.load %arg6[%c0_152, %c8_153, %c0_154] : memref<4x18x8xf32, #tpu.memory_space<vmem>>, vector<4x1x8xf32>
    %176 = vector.shape_cast %175 : vector<4x1x8xf32> to vector<4x8xf32>
    %c0_155 = arith.constant 0 : index
    %c9_156 = arith.constant 9 : index
    %c0_157 = arith.constant 0 : index
    %177 = vector.load %arg6[%c0_155, %c9_156, %c0_157] : memref<4x18x8xf32, #tpu.memory_space<vmem>>, vector<4x1x8xf32>
    %178 = vector.shape_cast %177 : vector<4x1x8xf32> to vector<4x8xf32>
    %179 = arith.maximumf %176, %178 : vector<4x8xf32>
    %c0_158 = arith.constant 0 : index
    %c10_159 = arith.constant 10 : index
    %c0_160 = arith.constant 0 : index
    %180 = vector.load %arg6[%c0_158, %c10_159, %c0_160] : memref<4x18x8xf32, #tpu.memory_space<vmem>>, vector<4x1x8xf32>
    %181 = vector.shape_cast %180 : vector<4x1x8xf32> to vector<4x8xf32>
    %182 = arith.maximumf %179, %181 : vector<4x8xf32>
    %c0_161 = arith.constant 0 : index
    %c11_162 = arith.constant 11 : index
    %c0_163 = arith.constant 0 : index
    %183 = vector.load %arg6[%c0_161, %c11_162, %c0_163] : memref<4x18x8xf32, #tpu.memory_space<vmem>>, vector<4x1x8xf32>
    %184 = vector.shape_cast %183 : vector<4x1x8xf32> to vector<4x8xf32>
    %185 = arith.maximumf %182, %184 : vector<4x8xf32>
    %c0_164 = arith.constant 0 : index
    %c12_165 = arith.constant 12 : index
    %c0_166 = arith.constant 0 : index
    %186 = vector.load %arg6[%c0_164, %c12_165, %c0_166] : memref<4x18x8xf32, #tpu.memory_space<vmem>>, vector<4x1x8xf32>
    %187 = vector.shape_cast %186 : vector<4x1x8xf32> to vector<4x8xf32>
    %188 = arith.maximumf %185, %187 : vector<4x8xf32>
    %c0_167 = arith.constant 0 : index
    %c0_168 = arith.constant 0 : index
    %c2_169 = arith.constant 2 : index
    %c0_170 = arith.constant 0 : index
    %189 = vector.load %arg4[%c0_167, %c0_168, %c2_169, %c0_170] : memref<1x4x4x8xf32, #tpu.memory_space<vmem>>, vector<1x4x1x8xf32>
    %190 = vector.shape_cast %189 : vector<1x4x1x8xf32> to vector<4x8xf32>
    %191 = vector.shape_cast %188 : vector<4x8xf32> to vector<1x4x1x8xf32>
    tpu.vector_store %arg4[%c0_167, %c0_168, %c2_169, %c0_170], %191 {strides = array<i32>} : memref<1x4x4x8xf32, #tpu.memory_space<vmem>>, vector<1x4x1x8xf32>,
    %c0_171 = arith.constant 0 : index
    %c12_172 = arith.constant 12 : index
    %c0_173 = arith.constant 0 : index
    %192 = vector.load %arg6[%c0_171, %c12_172, %c0_173] : memref<4x18x8xf32, #tpu.memory_space<vmem>>, vector<4x1x8xf32>
    %193 = vector.shape_cast %192 : vector<4x1x8xf32> to vector<4x8xf32>
    %c0_174 = arith.constant 0 : index
    %c13_175 = arith.constant 13 : index
    %c0_176 = arith.constant 0 : index
    %194 = vector.load %arg6[%c0_174, %c13_175, %c0_176] : memref<4x18x8xf32, #tpu.memory_space<vmem>>, vector<4x1x8xf32>
    %195 = vector.shape_cast %194 : vector<4x1x8xf32> to vector<4x8xf32>
    %196 = arith.maximumf %193, %195 : vector<4x8xf32>
    %c0_177 = arith.constant 0 : index
    %c14_178 = arith.constant 14 : index
    %c0_179 = arith.constant 0 : index
    %197 = vector.load %arg6[%c0_177, %c14_178, %c0_179] : memref<4x18x8xf32, #tpu.memory_space<vmem>>, vector<4x1x8xf32>
    %198 = vector.shape_cast %197 : vector<4x1x8xf32> to vector<4x8xf32>
    %199 = arith.maximumf %196, %198 : vector<4x8xf32>
    %c0_180 = arith.constant 0 : index
    %c15_181 = arith.constant 15 : index
    %c0_182 = arith.constant 0 : index
    %200 = vector.load %arg6[%c0_180, %c15_181, %c0_182] : memref<4x18x8xf32, #tpu.memory_space<vmem>>, vector<4x1x8xf32>
    %201 = vector.shape_cast %200 : vector<4x1x8xf32> to vector<4x8xf32>
    %202 = arith.maximumf %199, %201 : vector<4x8xf32>
    %c0_183 = arith.constant 0 : index
    %c16_184 = arith.constant 16 : index
    %c0_185 = arith.constant 0 : index
    %203 = vector.load %arg6[%c0_183, %c16_184, %c0_185] : memref<4x18x8xf32, #tpu.memory_space<vmem>>, vector<4x1x8xf32>
    %204 = vector.shape_cast %203 : vector<4x1x8xf32> to vector<4x8xf32>
    %205 = arith.maximumf %202, %204 : vector<4x8xf32>
    %c0_186 = arith.constant 0 : index
    %c0_187 = arith.constant 0 : index
    %c3_188 = arith.constant 3 : index
    %c0_189 = arith.constant 0 : index
    %206 = vector.load %arg4[%c0_186, %c0_187, %c3_188, %c0_189] : memref<1x4x4x8xf32, #tpu.memory_space<vmem>>, vector<1x4x1x8xf32>
    %207 = vector.shape_cast %206 : vector<1x4x1x8xf32> to vector<4x8xf32>
    %208 = vector.shape_cast %205 : vector<4x8xf32> to vector<1x4x1x8xf32>
    tpu.vector_store %arg4[%c0_186, %c0_187, %c3_188, %c0_189], %208 {strides = array<i32>} : memref<1x4x4x8xf32, #tpu.memory_space<vmem>>, vector<1x4x1x8xf32>,
    return
  }
  func.func @transform_0(%arg0: i32) -> (i32, i32, i32) {
    %c0_i32 = arith.constant 0 : i32
    %c0_i32_0 = arith.constant 0 : i32
    %c0_i32_1 = arith.constant 0 : i32
    return %arg0, %c0_i32, %c0_i32_0 : i32, i32, i32
  }
  func.func @transform_1(%arg0: i32) -> (i32, i32) {
    %c0_i32 = arith.constant 0 : i32
    %c0_i32_0 = arith.constant 0 : i32
    %c0_i32_1 = arith.constant 0 : i32
    return %c0_i32, %c0_i32_0 : i32, i32
  }
  func.func @transform_2(%arg0: i32) -> (i32, i32) {
    %c0_i32 = arith.constant 0 : i32
    %c0_i32_0 = arith.constant 0 : i32
    %c0_i32_1 = arith.constant 0 : i32
    return %c0_i32, %c0_i32_0 : i32, i32
  }
  func.func @transform_3(%arg0: i32) -> (i32, i32, i32, i32) {
    %c0_i32 = arith.constant 0 : i32
    %c0_i32_0 = arith.constant 0 : i32
    %c0_i32_1 = arith.constant 0 : i32
    %c0_i32_2 = arith.constant 0 : i32
    return %arg0, %c0_i32, %c0_i32_0, %c0_i32_1 : i32, i32, i32, i32
  }
}

</mosaic_0001>

<llo_original>
// kernel: tpu_custom_call.1
$region0: #{tpu_custom_call.1}
  #allocation0 [shape = 'u32[]', space=smem, size = 0x4, offset = 0x4, fixed_abs, tag = 'smem constant byte address 0x4 - core index']
  #allocation1 [shape = 'u32[72,128]{1,0:T(1,128)}', space=vmem, size = 0x9000, scoped, tag = 'internal scratch']
  #allocation2 [shape = 'f32[18,18,8]{2,1,0:T(8,128)}', space=vmem, size = 0x36000, scoped, tag = 'scratch operand']
  #allocation3 [shape = 'f32[4,18,8]{2,1,0:T(8,128)}', space=vmem, size = 0xc000, scoped, tag = 'scratch operand']
  %s0 = inlined_call_operand.vmem [shape: bf16[2,256,4], index: 0, kind: input, shape index: {}]
  %s1 = inlined_call_operand.vmem [shape: bf16[4,8], index: 1, kind: input, shape index: {}]
  %s2 = inlined_call_operand.vmem [shape: f32[1,8], index: 2, kind: input, shape index: {}]
  %s3 = inlined_call_operand.hbm [shape: f32[2,4,4,8], index: 3, kind: output, shape index: {}]
  %s4 = sld [smem:[#allocation0]]
  $region45: #{tpu_custom_call.1} parent=0
    _
  %s6 = ssub.s32 1, %s4
  %s7 = scalar_select 0, %s6, %s4
  $region1: #{tpu_custom_call.1} parent=0
    #allocation4 [shape = 'u8[16384]{0}', space=vmem, size = 0x4000, scoped, tag = 'output window, operand 0']
    #allocation5 [shape = 's32[2]{0}', space=sflag, size = 0x8, scoped, tag = 'scoped memory for tpu_custom_call.1']
    %8 = vsyncpa [#allocation5], 0
    %s9 = scalar_lea.sflag [#allocation5], 1
    %10 = vsyncpa %s9, 0
    loop: start=0, step=1, limit=4
    $region2: #{tpu_custom_call.1} parent=1 // loop_pre_header
      _
    $region3: #{tpu_custom_call.1} parent=1 // loop_header
      %s12 = sphi 0, %s16
      %p13 = scmp.ge.s32.totalorder %s12, 4
      %s22 = sphi 0, %s24
      %s25 = sphi 0, %s22
      %s26 = sphi 0, %s25
      %s42 = sphi 0, %s26
      %s46 = sphi 0, %s46
      %s48 = sphi 0, %s46
      %s49 = sphi 0, %s48
      %s63 = sphi 0, %s49
      %s67 = sphi 0, %s67
      %s69 = sphi 0, %s67
      %s70 = sphi 0, %s69
      %s84 = sphi 0, %s70
      %s90 = sphi 0, %s92
      %s93 = sphi 0, %s90
      %s94 = sphi 0, %s93
      %s110 = sphi 0, %s94
    $region4: #{tpu_custom_call.1} parent=1 // loop_header_branch
      %15 = sbr.rel (%p13) target = $region8
    $region5: #{tpu_custom_call.1} parent=1 // loop_body
      %s17 = ssub.s32 %s12, 1
      %s18 = ssub.s32 %s12, 2
      %s19 = sadd.s32 %s12, 1
      %s20 = ssub.s32 %s12, %s19
      %p21 = scmp.eq.s32.totalorder %s20, 0
      %s23 = sadd.s32 %s22, 1
      %s24 = scalar_select %p21, %s22, %s23
      %p27 = pneg %p21
      %p28 = scmp.eq.s32.totalorder %s12, 1
      %p29 = por %p27, %p28
      %p30 = scmp.ne.s32.totalorder %s22, %s25
      %p31 = scmp.eq.s32.totalorder %s12, 0
      %p32 = por %p30, %p31
      %p33 = scmp.ne.s32.totalorder %s22, %s25
      %p34 = scmp.eq.s32.totalorder %s17, 1
      %p35 = por %p33, %p34
      %p36 = scmp.ne.s32.totalorder %s25, %s26
      %p37 = scmp.eq.s32.totalorder %s17, 0
      %p38 = por %p36, %p37
      %p39 = scmp.ne.s32.totalorder %s25, %s26
      %p40 = scmp.eq.s32.totalorder %s18, 1
      %p41 = por %p39, %p40
      %p43 = scmp.ne.s32.totalorder %s26, %s42
      %p44 = scmp.eq.s32.totalorder %s18, 0
      %p45 = por %p43, %p44
      %s47 = sadd.s32 %s46, 1
      %p50 = scmp.eq.s32.totalorder %s12, 1
      %p51 = scmp.ne.s32.totalorder %s46, %s48
      %p52 = scmp.eq.s32.totalorder %s12, 0
      %p53 = por %p51, %p52
      %p54 = scmp.ne.s32.totalorder %s46, %s48
      %p55 = scmp.eq.s32.totalorder %s17, 1
      %p56 = por %p54, %p55
      %p57 = scmp.ne.s32.totalorder %s48, %s49
      %p58 = scmp.eq.s32.totalorder %s17, 0
      %p59 = por %p57, %p58
      %p60 = scmp.ne.s32.totalorder %s48, %s49
      %p61 = scmp.eq.s32.totalorder %s18, 1
      %p62 = por %p60, %p61
      %p64 = scmp.ne.s32.totalorder %s49, %s63
      %p65 = scmp.eq.s32.totalorder %s18, 0
      %p66 = por %p64, %p65
      %s68 = sadd.s32 %s67, 1
      %p71 = scmp.eq.s32.totalorder %s12, 1
      %p72 = scmp.ne.s32.totalorder %s67, %s69
      %p73 = scmp.eq.s32.totalorder %s12, 0
      %p74 = por %p72, %p73
      %p75 = scmp.ne.s32.totalorder %s67, %s69
      %p76 = scmp.eq.s32.totalorder %s17, 1
      %p77 = por %p75, %p76
      %p78 = scmp.ne.s32.totalorder %s69, %s70
      %p79 = scmp.eq.s32.totalorder %s17, 0
      %p80 = por %p78, %p79
      %p81 = scmp.ne.s32.totalorder %s69, %s70
      %p82 = scmp.eq.s32.totalorder %s18, 1
      %p83 = por %p81, %p82
      %p85 = scmp.ne.s32.totalorder %s70, %s84
      %p86 = scmp.eq.s32.totalorder %s18, 0
      %p87 = por %p85, %p86
      %s88 = ssub.s32 %s12, %s19
      %p89 = scmp.eq.s32.totalorder %s88, 0
      %s91 = sadd.s32 %s90, 1
      %s92 = scalar_select %p89, %s90, %s91
      %p95 = pneg %p89
      %p96 = scmp.eq.s32.totalorder %s12, 1
      %p97 = por %p95, %p96
      %p98 = scmp.ne.s32.totalorder %s90, %s93
      %p99 = scmp.eq.s32.totalorder %s12, 0
      %p100 = por %p98, %p99
      %p101 = scmp.ne.s32.totalorder %s90, %s93
      %p102 = scmp.eq.s32.totalorder %s17, 1
      %p103 = por %p101, %p102
      %p104 = scmp.ne.s32.totalorder %s93, %s94
      %p105 = scmp.eq.s32.totalorder %s17, 0
      %p106 = por %p104, %p105
      %p107 = scmp.ne.s32.totalorder %s93, %s94
      %p108 = scmp.eq.s32.totalorder %s18, 1
      %p109 = por %p107, %p108
      %p111 = scmp.ne.s32.totalorder %s94, %s110
      %p112 = scmp.eq.s32.totalorder %s18, 0
      %p113 = por %p111, %p112
      %p114 = scmp.le.s32.totalorder 1, %s12
      %p115 = scmp.lt.s32.totalorder %s12, 3
      %p116 = pnand %p114, %p115
      %p117 = pneg %p116
      // Predicated region
      $region9: #{tpu_custom_call.1} parent=5 // pred_check
        _
      $region10: #{tpu_custom_call.1} parent=5 // pred_check_branch
        %119 = sbr.rel (%p116) target = $region12
      $region11: #{tpu_custom_call.1} parent=5 // pred_region
        %s120 = ssub.s32 %s12, 1
        // Predicated region
        $region13: #{tpu_custom_call.1} parent=11 // pred_check
          %p121 = pneg %p59
        $region14: #{tpu_custom_call.1} parent=11 // pred_check_branch
          %123 = sbr.rel (%p121) target = $region16
        $region15: #{tpu_custom_call.1} parent=11 // pred_region
          _
        $region16: #{tpu_custom_call.1} parent=11 // pred_fallthru
          _
        // Predicated region
        $region17: #{tpu_custom_call.1} parent=11 // pred_check
          %p124 = pneg %p80
        $region18: #{tpu_custom_call.1} parent=11 // pred_check_branch
          %126 = sbr.rel (%p124) target = $region20
        $region19: #{tpu_custom_call.1} parent=11 // pred_region
          _
        $region20: #{tpu_custom_call.1} parent=11 // pred_fallthru
          _
      $region12: #{tpu_custom_call.1} parent=5 // pred_fallthru
        _
      %p127 = scmp.lt.s32.totalorder %s12, 2
      // Predicated region
      $region21: #{tpu_custom_call.1} parent=5 // pred_check
        %p128 = pneg %p127
      $region22: #{tpu_custom_call.1} parent=5 // pred_check_branch
        %130 = sbr.rel (%p128) target = $region24
      $region23: #{tpu_custom_call.1} parent=5 // pred_region
        // Predicated region
        $region25: #{tpu_custom_call.1} parent=23 // pred_check
          %p131 = pneg %p32
        $region26: #{tpu_custom_call.1} parent=23 // pred_check_branch
          %133 = sbr.rel (%p131) target = $region28
        $region27: #{tpu_custom_call.1} parent=23 // pred_region
          %p134 = scmp.lt.s32.totalorder %s12, 1
          %s135 = scalar_select %p134, %s12, 1
          %s136 = smul.addr %s135, 32
          %s137 = smul.addr %s136, 4
          %s138 = scalar_lea.vmem %s0, %s137
        $region28: #{tpu_custom_call.1} parent=23 // pred_fallthru
          _
      $region24: #{tpu_custom_call.1} parent=5 // pred_fallthru
        _
      %p139 = scmp.le.s32.totalorder 1, %s12
      %p140 = scmp.lt.s32.totalorder %s12, 3
      %p141 = pnand %p139, %p140
      %p142 = pneg %p141
      // Predicated region
      $region29: #{tpu_custom_call.1} parent=5 // pred_check
        _
      $region30: #{tpu_custom_call.1} parent=5 // pred_check_branch
        %144 = sbr.rel (%p141) target = $region32
      $region31: #{tpu_custom_call.1} parent=5 // pred_region
        %s145 = ssub.s32 %s12, 1
        %p146 = scmp.lt.s32.totalorder %s17, 1
        %s147 = scalar_select %p146, %s17, 1
        %s148 = smul.addr %s147, 32
        %s149 = smul.addr %s148, 4
        %s150 = scalar_lea.vmem %s0, %s149
        %p151 = pneg %p38
        %p152 = pneg %p35
        %p153 = pneg %p59
        %p154 = pneg %p56
        %p155 = pneg %p80
        %p156 = pneg %p77
        %p157 = pneg %p106
        %p158 = pneg %p103
        %s159 = sand.u32 %s93, 1
        %s160 = scalar_lea.sflag [#allocation5], %s159
        %s161 = sand.u32 %s93, 1
        %s162 = smul.addr %s161, 16
        %s163 = scalar_lea.vmem [#allocation4], %s162
        %p164 = scmp.lt.s32.totalorder %s17, 1
        %s165 = scalar_select %p164, %s17, 1
        %s166 = smul.addr %s165, 32
        %s167 = smul.addr %s166, 4
        %s168 = scalar_lea.vmem %s0, %s167
        %v170 = vld [vmem:[%s168] sm:$0xf]
        %v171 = vld [vmem:[%s168 + $0x4] sm:$0xf]
        %v172 = vld [vmem:[%s168 + $0x8] sm:$0xf]
        %v173 = vld [vmem:[%s168 + $0xc] sm:$0xf]
        %v174 = vld [vmem:[%s168 + $0x10] sm:$0xf]
        %v175 = vld [vmem:[%s168 + $0x14] sm:$0xf]
        %v176 = vld [vmem:[%s168 + $0x18] sm:$0xf]
        %v177 = vld [vmem:[%s168 + $0x1c] sm:$0xf]
        %v178 = vld [vmem:[%s168 + $0x20] sm:$0xf]
        %v179 = vld [vmem:[%s168 + $0x24] sm:$0xf]
        %v180 = vld [vmem:[%s168 + $0x28] sm:$0xf]
        %v181 = vld [vmem:[%s168 + $0x2c] sm:$0xf]
        %v182 = vld [vmem:[%s168 + $0x30] sm:$0xf]
        %v183 = vld [vmem:[%s168 + $0x34] sm:$0xf]
        %v184 = vld [vmem:[%s168 + $0x38] sm:$0xf]
        %v185 = vld [vmem:[%s168 + $0x3c] sm:$0xf]
        %v186 = vld [vmem:[%s168 + $0x40] sm:$0xf]
        %v187 = vld [vmem:[%s168 + $0x44] sm:$0xf]
        %v188 = vld [vmem:[%s168 + $0x48] sm:$0xf]
        %v189 = vld [vmem:[%s168 + $0x4c] sm:$0xf]
        %v190 = vld [vmem:[%s168 + $0x50] sm:$0xf]
        %v191 = vld [vmem:[%s168 + $0x54] sm:$0xf]
        %v192 = vld [vmem:[%s168 + $0x58] sm:$0xf]
        %v193 = vld [vmem:[%s168 + $0x5c] sm:$0xf]
        %v194 = vld [vmem:[%s168 + $0x60] sm:$0xf]
        %v195 = vld [vmem:[%s168 + $0x64] sm:$0xf]
        %v196 = vld [vmem:[%s168 + $0x68] sm:$0xf]
        %v197 = vld [vmem:[%s168 + $0x6c] sm:$0xf]
        %v198 = vld [vmem:[%s168 + $0x70] sm:$0xf]
        %v199 = vld [vmem:[%s168 + $0x74] sm:$0xf]
        %v200 = vld [vmem:[%s168 + $0x78] sm:$0xf]
        %v201 = vld [vmem:[%s168 + $0x7c] sm:$0xf]
        %v202 = vld [vmem:[%s1] sm:$0x3]
        %v203 = vld [vmem:[%s2] sm:$0x1]
        %v205 = vperm.slane %v203, 0
        %v239 = vunpack.c.l.b16 %v170
        %v240 = vunpack.c.l.b16 %v171
        %v241 = vunpack.c.l.b16 %v172
        %v242 = vunpack.c.l.b16 %v173
        %v243 = vunpack.c.l.b16 %v174
        %v244 = vunpack.c.l.b16 %v175
        %v245 = vunpack.c.l.b16 %v176
        %v246 = vunpack.c.l.b16 %v177
        %v247 = vunpack.c.l.b16 %v178
        %v248 = vunpack.c.l.b16 %v179
        %v249 = vunpack.c.l.b16 %v180
        %v250 = vunpack.c.l.b16 %v181
        %v251 = vunpack.c.l.b16 %v182
        %v252 = vunpack.c.l.b16 %v183
        %v253 = vunpack.c.l.b16 %v184
        %v254 = vunpack.c.l.b16 %v185
        %v255 = vunpack.c.l.b16 %v186
        %v256 = vunpack.c.l.b16 %v187
        %v257 = vunpack.c.l.b16 %v188
        %v258 = vunpack.c.l.b16 %v189
        %v259 = vunpack.c.l.b16 %v190
        %v260 = vunpack.c.l.b16 %v191
        %v261 = vunpack.c.l.b16 %v192
        %v262 = vunpack.c.l.b16 %v193
        %v263 = vunpack.c.l.b16 %v194
        %v264 = vunpack.c.l.b16 %v195
        %v265 = vunpack.c.l.b16 %v196
        %v266 = vunpack.c.l.b16 %v197
        %v267 = vunpack.c.l.b16 %v198
        %v268 = vunpack.c.l.b16 %v199
        %v269 = vunpack.c.l.b16 %v200
        %v270 = vunpack.c.l.b16 %v201
        %v271 = vpack.c.b16 %v240, %v239
        %v272 = vpack.c.b16 %v242, %v241
        %v273 = vpack.c.b16 %v244, %v243
        %v274 = vpack.c.b16 %v246, %v245
        %v275 = vpack.c.b16 %v248, %v247
        %v276 = vpack.c.b16 %v250, %v249
        %v277 = vpack.c.b16 %v252, %v251
        %v278 = vpack.c.b16 %v254, %v253
        %v279 = vpack.c.b16 %v256, %v255
        %v280 = vpack.c.b16 %v258, %v257
        %v281 = vpack.c.b16 %v260, %v259
        %v282 = vpack.c.b16 %v262, %v261
        %v283 = vpack.c.b16 %v264, %v263
        %v284 = vpack.c.b16 %v266, %v265
        %v285 = vpack.c.b16 %v268, %v267
        %v286 = vpack.c.b16 %v270, %v269
        %vm287 = vcmask 31744
        %v289 = vsel %vm287, %v271, 0
        %v292 = vsel %vm287, %v272, 0
        %v295 = vsel %vm287, %v273, 0
        %v298 = vsel %vm287, %v274, 0
        %v301 = vsel %vm287, %v275, 0
        %v304 = vsel %vm287, %v276, 0
        %v307 = vsel %vm287, %v277, 0
        %v310 = vsel %vm287, %v278, 0
        %v313 = vsel %vm287, %v279, 0
        %v316 = vsel %vm287, %v280, 0
        %v319 = vsel %vm287, %v281, 0
        %v322 = vsel %vm287, %v282, 0
        %v325 = vsel %vm287, %v283, 0
        %v328 = vsel %vm287, %v284, 0
        %v331 = vsel %vm287, %v285, 0
        %v334 = vsel %vm287, %v286, 0
        %vm336 = vcmask 1041408
        %v338 = vsel %vm336, %v202, 0
        %340 = vmatpush.bf16.msra.mxu0 0
        %341 = vmatpush.bf16.msra.mxu0 0
        %342 = vmatpush.bf16.msra.mxu0 0
        %343 = vmatpush.bf16.msra.mxu0 0
        %344 = vmatpush.bf16.msra.mxu0 0
        %345 = vmatpush.bf16.msra.mxu0 0
        %346 = vmatpush.bf16.msra.mxu0 0
        %347 = vmatpush.bf16.msra.mxu0 %v338
        %348 = vmatmul.bf16.gmra.mxu0 %v289
        %v349 = vpop.f32.mrf.mxu0
        %v350 = vadd.f32 %v205, %v349
        %v351 = vpop.f32.mrf.mxu0
        %v352 = vadd.f32 %v205, %v351
        %353 = vmatmul.bf16.gmra.mxu0 %v292
        %v354 = vpop.f32.mrf.mxu0
        %v355 = vadd.f32 %v205, %v354
        %v356 = vpop.f32.mrf.mxu0
        %v357 = vadd.f32 %v205, %v356
        %358 = vmatmul.bf16.gmra.mxu0 %v295
        %v359 = vpop.f32.mrf.mxu0
        %v360 = vadd.f32 %v205, %v359
        %v361 = vpop.f32.mrf.mxu0
        %v362 = vadd.f32 %v205, %v361
        %363 = vmatmul.bf16.gmra.mxu0 %v298
        %v364 = vpop.f32.mrf.mxu0
        %v365 = vadd.f32 %v205, %v364
        %v366 = vpop.f32.mrf.mxu0
        %v367 = vadd.f32 %v205, %v366
        %368 = vmatmul.bf16.gmra.mxu0 %v301
        %v369 = vpop.f32.mrf.mxu0
        %v370 = vadd.f32 %v205, %v369
        %v371 = vpop.f32.mrf.mxu0
        %v372 = vadd.f32 %v205, %v371
        %373 = vmatmul.bf16.gmra.mxu0 %v304
        %v374 = vpop.f32.mrf.mxu0
        %v375 = vadd.f32 %v205, %v374
        %v376 = vpop.f32.mrf.mxu0
        %v377 = vadd.f32 %v205, %v376
        %378 = vmatmul.bf16.gmra.mxu0 %v307
        %v379 = vpop.f32.mrf.mxu0
        %v380 = vadd.f32 %v205, %v379
        %v381 = vpop.f32.mrf.mxu0
        %v382 = vadd.f32 %v205, %v381
        %383 = vmatmul.bf16.gmra.mxu0 %v310
        %v384 = vpop.f32.mrf.mxu0
        %v385 = vadd.f32 %v205, %v384
        %v386 = vpop.f32.mrf.mxu0
        %v387 = vadd.f32 %v205, %v386
        %388 = vmatmul.bf16.gmra.mxu0 %v313
        %v389 = vpop.f32.mrf.mxu0
        %v390 = vadd.f32 %v205, %v389
        %v391 = vpop.f32.mrf.mxu0
        %v392 = vadd.f32 %v205, %v391
        %393 = vmatmul.bf16.gmra.mxu0 %v316
        %v394 = vpop.f32.mrf.mxu0
        %v395 = vadd.f32 %v205, %v394
        %v396 = vpop.f32.mrf.mxu0
        %v397 = vadd.f32 %v205, %v396
        %398 = vmatmul.bf16.gmra.mxu0 %v319
        %v399 = vpop.f32.mrf.mxu0
        %v400 = vadd.f32 %v205, %v399
        %v401 = vpop.f32.mrf.mxu0
        %v402 = vadd.f32 %v205, %v401
        %403 = vmatmul.bf16.gmra.mxu0 %v322
        %v404 = vpop.f32.mrf.mxu0
        %v405 = vadd.f32 %v205, %v404
        %v406 = vpop.f32.mrf.mxu0
        %v407 = vadd.f32 %v205, %v406
        %408 = vmatmul.bf16.gmra.mxu0 %v325
        %v409 = vpop.f32.mrf.mxu0
        %v410 = vadd.f32 %v205, %v409
        %v411 = vpop.f32.mrf.mxu0
        %v412 = vadd.f32 %v205, %v411
        %413 = vmatmul.bf16.gmra.mxu0 %v328
        %v414 = vpop.f32.mrf.mxu0
        %v415 = vadd.f32 %v205, %v414
        %v416 = vpop.f32.mrf.mxu0
        %v417 = vadd.f32 %v205, %v416
        %418 = vmatmul.bf16.gmra.mxu0 %v331
        %v419 = vpop.f32.mrf.mxu0
        %v420 = vadd.f32 %v205, %v419
        %v421 = vpop.f32.mrf.mxu0
        %v422 = vadd.f32 %v205, %v421
        %423 = vmatmul.bf16.gmra.mxu0 %v334
        %v424 = vpop.f32.mrf.mxu0
        %v425 = vadd.f32 %v205, %v424
        %v426 = vpop.f32.mrf.mxu0
        %v427 = vadd.f32 %v205, %v426
        %428 = vdwg.mxu0
        %vm429 = vcmask 64512
        %430 = vst.msk [vmem:[#allocation2] sm:$0xff] %vm429, -inf
        %431 = vst.msk [vmem:[#allocation2 + $0x8] sm:$0xff] %vm429, -inf
        %vm432 = vcmask 58368
        %433 = vst.msk [vmem:[#allocation2 + $0x10] sm:$0x3] %vm432, -inf
        %434 = vst.msk [vmem:[#allocation2 + $0x18] sm:$0xff] %vm429, -inf
        %435 = vst.msk [vmem:[#allocation2 + $0x20] sm:$0xff] %vm429, -inf
        %436 = vst.msk [vmem:[#allocation2 + $0x28] sm:$0x3] %vm432, -inf
        %437 = vst.msk [vmem:[#allocation2 + $0x30] sm:$0xff] %vm429, -inf
        %438 = vst.msk [vmem:[#allocation2 + $0x38] sm:$0xff] %vm429, -inf
        %439 = vst.msk [vmem:[#allocation2 + $0x40] sm:$0x3] %vm432, -inf
        %440 = vst.msk [vmem:[#allocation2 + $0x48] sm:$0xff] %vm429, -inf
        %441 = vst.msk [vmem:[#allocation2 + $0x50] sm:$0xff] %vm429, -inf
        %442 = vst.msk [vmem:[#allocation2 + $0x58] sm:$0x3] %vm432, -inf
        %443 = vst.msk [vmem:[#allocation2 + $0x60] sm:$0xff] %vm429, -inf
        %444 = vst.msk [vmem:[#allocation2 + $0x68] sm:$0xff] %vm429, -inf
        %445 = vst.msk [vmem:[#allocation2 + $0x70] sm:$0x3] %vm432, -inf
        %446 = vst.msk [vmem:[#allocation2 + $0x78] sm:$0xff] %vm429, -inf
        %447 = vst.msk [vmem:[#allocation2 + $0x80] sm:$0xff] %vm429, -inf
        %448 = vst.msk [vmem:[#allocation2 + $0x88] sm:$0x3] %vm432, -inf
        %449 = vst.msk [vmem:[#allocation2 + $0x90] sm:$0xff] %vm429, -inf
        %450 = vst.msk [vmem:[#allocation2 + $0x98] sm:$0xff] %vm429, -inf
        %451 = vst.msk [vmem:[#allocation2 + $0xa0] sm:$0x3] %vm432, -inf
        %452 = vst.msk [vmem:[#allocation2 + $0xa8] sm:$0xff] %vm429, -inf
        %453 = vst.msk [vmem:[#allocation2 + $0xb0] sm:$0xff] %vm429, -inf
        %454 = vst.msk [vmem:[#allocation2 + $0xb8] sm:$0x3] %vm432, -inf
        %455 = vst.msk [vmem:[#allocation2 + $0xc0] sm:$0xff] %vm429, -inf
        %456 = vst.msk [vmem:[#allocation2 + $0xc8] sm:$0xff] %vm429, -inf
        %457 = vst.msk [vmem:[#allocation2 + $0xd0] sm:$0x3] %vm432, -inf
        %458 = vst.msk [vmem:[#allocation2 + $0xd8] sm:$0xff] %vm429, -inf
        %459 = vst.msk [vmem:[#allocation2 + $0xe0] sm:$0xff] %vm429, -inf
        %460 = vst.msk [vmem:[#allocation2 + $0xe8] sm:$0x3] %vm432, -inf
        %461 = vst.msk [vmem:[#allocation2 + $0xf0] sm:$0xff] %vm429, -inf
        %462 = vst.msk [vmem:[#allocation2 + $0xf8] sm:$0xff] %vm429, -inf
        %463 = vst.msk [vmem:[#allocation2 + $0x100] sm:$0x3] %vm432, -inf
        %464 = vst.msk [vmem:[#allocation2 + $0x108] sm:$0xff] %vm429, -inf
        %465 = vst.msk [vmem:[#allocation2 + $0x110] sm:$0xff] %vm429, -inf
        %466 = vst.msk [vmem:[#allocation2 + $0x118] sm:$0x3] %vm432, -inf
        %467 = vst.msk [vmem:[#allocation2 + $0x120] sm:$0xff] %vm429, -inf
        %468 = vst.msk [vmem:[#allocation2 + $0x128] sm:$0xff] %vm429, -inf
        %469 = vst.msk [vmem:[#allocation2 + $0x130] sm:$0x3] %vm432, -inf
        %470 = vst.msk [vmem:[#allocation2 + $0x138] sm:$0xff] %vm429, -inf
        %471 = vst.msk [vmem:[#allocation2 + $0x140] sm:$0xff] %vm429, -inf
        %472 = vst.msk [vmem:[#allocation2 + $0x148] sm:$0x3] %vm432, -inf
        %473 = vst.msk [vmem:[#allocation2 + $0x150] sm:$0xff] %vm429, -inf
        %474 = vst.msk [vmem:[#allocation2 + $0x158] sm:$0xff] %vm429, -inf
        %475 = vst.msk [vmem:[#allocation2 + $0x160] sm:$0x3] %vm432, -inf
        %476 = vst.msk [vmem:[#allocation2 + $0x168] sm:$0xff] %vm429, -inf
        %477 = vst.msk [vmem:[#allocation2 + $0x170] sm:$0xff] %vm429, -inf
        %478 = vst.msk [vmem:[#allocation2 + $0x178] sm:$0x3] %vm432, -inf
        %479 = vst.msk [vmem:[#allocation2 + $0x180] sm:$0xff] %vm429, -inf
        %480 = vst.msk [vmem:[#allocation2 + $0x188] sm:$0xff] %vm429, -inf
        %481 = vst.msk [vmem:[#allocation2 + $0x190] sm:$0x3] %vm432, -inf
        %482 = vst.msk [vmem:[#allocation2 + $0x198] sm:$0xff] %vm429, -inf
        %483 = vst.msk [vmem:[#allocation2 + $0x1a0] sm:$0xff] %vm429, -inf
        %484 = vst.msk [vmem:[#allocation2 + $0x1a8] sm:$0x3] %vm432, -inf
        %s485 = scalar_lea.vmem [#allocation2], 24
        %486 = vst.msk [vmem:[%s485 + $0x1] sm:$0xff] %vm429, %v350
        %487 = vst.msk [vmem:[%s485 + $0x9] sm:$0xff] %vm429, %v352
        %s488 = scalar_lea.vmem [#allocation2], 48
        %489 = vst.msk [vmem:[%s488 + $0x1] sm:$0xff] %vm429, %v355
        %490 = vst.msk [vmem:[%s488 + $0x9] sm:$0xff] %vm429, %v357
        %s491 = scalar_lea.vmem [#allocation2], 72
        %492 = vst.msk [vmem:[%s491 + $0x1] sm:$0xff] %vm429, %v360
        %493 = vst.msk [vmem:[%s491 + $0x9] sm:$0xff] %vm429, %v362
        %s494 = scalar_lea.vmem [#allocation2], 96
        %495 = vst.msk [vmem:[%s494 + $0x1] sm:$0xff] %vm429, %v365
        %496 = vst.msk [vmem:[%s494 + $0x9] sm:$0xff] %vm429, %v367
        %s497 = scalar_lea.vmem [#allocation2], 120
        %498 = vst.msk [vmem:[%s497 + $0x1] sm:$0xff] %vm429, %v370
        %499 = vst.msk [vmem:[%s497 + $0x9] sm:$0xff] %vm429, %v372
        %s500 = scalar_lea.vmem [#allocation2], 144
        %501 = vst.msk [vmem:[%s500 + $0x1] sm:$0xff] %vm429, %v375
        %502 = vst.msk [vmem:[%s500 + $0x9] sm:$0xff] %vm429, %v377
        %s503 = scalar_lea.vmem [#allocation2], 168
        %504 = vst.msk [vmem:[%s503 + $0x1] sm:$0xff] %vm429, %v380
        %505 = vst.msk [vmem:[%s503 + $0x9] sm:$0xff] %vm429, %v382
        %s506 = scalar_lea.vmem [#allocation2], 192
        %507 = vst.msk [vmem:[%s506 + $0x1] sm:$0xff] %vm429, %v385
        %508 = vst.msk [vmem:[%s506 + $0x9] sm:$0xff] %vm429, %v387
        %s509 = scalar_lea.vmem [#allocation2], 216
        %510 = vst.msk [vmem:[%s509 + $0x1] sm:$0xff] %vm429, %v390
        %511 = vst.msk [vmem:[%s509 + $0x9] sm:$0xff] %vm429, %v392
        %s512 = scalar_lea.vmem [#allocation2], 240
        %513 = vst.msk [vmem:[%s512 + $0x1] sm:$0xff] %vm429, %v395
        %514 = vst.msk [vmem:[%s512 + $0x9] sm:$0xff] %vm429, %v397
        %s515 = scalar_lea.vmem [#allocation2], 264
        %516 = vst.msk [vmem:[%s515 + $0x1] sm:$0xff] %vm429, %v400
        %517 = vst.msk [vmem:[%s515 + $0x9] sm:$0xff] %vm429, %v402
        %s518 = scalar_lea.vmem [#allocation2], 288
        %519 = vst.msk [vmem:[%s518 + $0x1] sm:$0xff] %vm429, %v405
        %520 = vst.msk [vmem:[%s518 + $0x9] sm:$0xff] %vm429, %v407
        %s521 = scalar_lea.vmem [#allocation2], 312
        %522 = vst.msk [vmem:[%s521 + $0x1] sm:$0xff] %vm429, %v410
        %523 = vst.msk [vmem:[%s521 + $0x9] sm:$0xff] %vm429, %v412
        %s524 = scalar_lea.vmem [#allocation2], 336
        %525 = vst.msk [vmem:[%s524 + $0x1] sm:$0xff] %vm429, %v415
        %526 = vst.msk [vmem:[%s524 + $0x9] sm:$0xff] %vm429, %v417
        %s527 = scalar_lea.vmem [#allocation2], 360
        %528 = vst.msk [vmem:[%s527 + $0x1] sm:$0xff] %vm429, %v420
        %529 = vst.msk [vmem:[%s527 + $0x9] sm:$0xff] %vm429, %v422
        %s530 = scalar_lea.vmem [#allocation2], 384
        %531 = vst.msk [vmem:[%s530 + $0x1] sm:$0xff] %vm429, %v425
        %532 = vst.msk [vmem:[%s530 + $0x9] sm:$0xff] %vm429, %v427
        %v533 = vld [vmem:[#allocation2] sm:$0xff]
        %v534 = vld [vmem:[#allocation2 + $0x8] sm:$0xff]
        %v535 = vld [vmem:[#allocation2 + $0x10] sm:$0x3]
        %v536 = vld [vmem:[%s485] sm:$0xff]
        %v537 = vld [vmem:[%s485 + $0x8] sm:$0xff]
        %v538 = vld [vmem:[%s485 + $0x10] sm:$0x3]
        %v539 = vmax.f32 %v533, %v536
        %v540 = vmax.f32 %v534, %v537
        %v541 = vmax.f32 %v535, %v538
        %v542 = vld [vmem:[%s488] sm:$0xff]
        %v543 = vld [vmem:[%s488 + $0x8] sm:$0xff]
        %v544 = vld [vmem:[%s488 + $0x10] sm:$0x3]
        %v545 = vmax.f32 %v539, %v542
        %v546 = vmax.f32 %v540, %v543
        %v547 = vmax.f32 %v541, %v544
        %v548 = vld [vmem:[%s491] sm:$0xff]
        %v549 = vld [vmem:[%s491 + $0x8] sm:$0xff]
        %v550 = vld [vmem:[%s491 + $0x10] sm:$0x3]
        %v551 = vmax.f32 %v545, %v548
        %v552 = vmax.f32 %v546, %v549
        %v553 = vmax.f32 %v547, %v550
        %v554 = vld [vmem:[%s494] sm:$0xff]
        %v555 = vld [vmem:[%s494 + $0x8] sm:$0xff]
        %v556 = vld [vmem:[%s494 + $0x10] sm:$0x3]
        %v557 = vmax.f32 %v551, %v554
        %v558 = vmax.f32 %v552, %v555
        %v559 = vmax.f32 %v553, %v556
        %560 = vst.msk [vmem:[#allocation3] sm:$0xff] %vm429, %v557
        %561 = vst.msk [vmem:[#allocation3 + $0x8] sm:$0xff] %vm429, %v558
        %562 = vst.msk [vmem:[#allocation3 + $0x10] sm:$0x3] %vm432, %v559
        %v563 = vld [vmem:[%s494] sm:$0xff]
        %v564 = vld [vmem:[%s494 + $0x8] sm:$0xff]
        %v565 = vld [vmem:[%s494 + $0x10] sm:$0x3]
        %v566 = vld [vmem:[%s497] sm:$0xff]
        %v567 = vld [vmem:[%s497 + $0x8] sm:$0xff]
        %v568 = vld [vmem:[%s497 + $0x10] sm:$0x3]
        %v569 = vmax.f32 %v563, %v566
        %v570 = vmax.f32 %v564, %v567
        %v571 = vmax.f32 %v565, %v568
        %v572 = vld [vmem:[%s500] sm:$0xff]
        %v573 = vld [vmem:[%s500 + $0x8] sm:$0xff]
        %v574 = vld [vmem:[%s500 + $0x10] sm:$0x3]
        %v575 = vmax.f32 %v569, %v572
        %v576 = vmax.f32 %v570, %v573
        %v577 = vmax.f32 %v571, %v574
        %v578 = vld [vmem:[%s503] sm:$0xff]
        %v579 = vld [vmem:[%s503 + $0x8] sm:$0xff]
        %v580 = vld [vmem:[%s503 + $0x10] sm:$0x3]
        %v581 = vmax.f32 %v575, %v578
        %v582 = vmax.f32 %v576, %v579
        %v583 = vmax.f32 %v577, %v580
        %v584 = vld [vmem:[%s506] sm:$0xff]
        %v585 = vld [vmem:[%s506 + $0x8] sm:$0xff]
        %v586 = vld [vmem:[%s506 + $0x10] sm:$0x3]
        %v587 = vmax.f32 %v581, %v584
        %v588 = vmax.f32 %v582, %v585
        %v589 = vmax.f32 %v583, %v586
        %s590 = scalar_lea.vmem [#allocation3], 24
        %591 = vst.msk [vmem:[%s590] sm:$0xff] %vm429, %v587
        %592 = vst.msk [vmem:[%s590 + $0x8] sm:$0xff] %vm429, %v588
        %593 = vst.msk [vmem:[%s590 + $0x10] sm:$0x3] %vm432, %v589
        %v594 = vld [vmem:[%s506] sm:$0xff]
        %v595 = vld [vmem:[%s506 + $0x8] sm:$0xff]
        %v596 = vld [vmem:[%s506 + $0x10] sm:$0x3]
        %v597 = vld [vmem:[%s509] sm:$0xff]
        %v598 = vld [vmem:[%s509 + $0x8] sm:$0xff]
        %v599 = vld [vmem:[%s509 + $0x10] sm:$0x3]
        %v600 = vmax.f32 %v594, %v597
        %v601 = vmax.f32 %v595, %v598
        %v602 = vmax.f32 %v596, %v599
        %v603 = vld [vmem:[%s512] sm:$0xff]
        %v604 = vld [vmem:[%s512 + $0x8] sm:$0xff]
        %v605 = vld [vmem:[%s512 + $0x10] sm:$0x3]
        %v606 = vmax.f32 %v600, %v603
        %v607 = vmax.f32 %v601, %v604
        %v608 = vmax.f32 %v602, %v605
        %v609 = vld [vmem:[%s515] sm:$0xff]
        %v610 = vld [vmem:[%s515 + $0x8] sm:$0xff]
        %v611 = vld [vmem:[%s515 + $0x10] sm:$0x3]
        %v612 = vmax.f32 %v606, %v609
        %v613 = vmax.f32 %v607, %v610
        %v614 = vmax.f32 %v608, %v611
        %v615 = vld [vmem:[%s518] sm:$0xff]
        %v616 = vld [vmem:[%s518 + $0x8] sm:$0xff]
        %v617 = vld [vmem:[%s518 + $0x10] sm:$0x3]
        %v618 = vmax.f32 %v612, %v615
        %v619 = vmax.f32 %v613, %v616
        %v620 = vmax.f32 %v614, %v617
        %s621 = scalar_lea.vmem [#allocation3], 48
        %622 = vst.msk [vmem:[%s621] sm:$0xff] %vm429, %v618
        %623 = vst.msk [vmem:[%s621 + $0x8] sm:$0xff] %vm429, %v619
        %624 = vst.msk [vmem:[%s621 + $0x10] sm:$0x3] %vm432, %v620
        %v625 = vld [vmem:[%s518] sm:$0xff]
        %v626 = vld [vmem:[%s518 + $0x8] sm:$0xff]
        %v627 = vld [vmem:[%s518 + $0x10] sm:$0x3]
        %v628 = vld [vmem:[%s521] sm:$0xff]
        %v629 = vld [vmem:[%s521 + $0x8] sm:$0xff]
        %v630 = vld [vmem:[%s521 + $0x10] sm:$0x3]
        %v631 = vmax.f32 %v625, %v628
        %v632 = vmax.f32 %v626, %v629
        %v633 = vmax.f32 %v627, %v630
        %v634 = vld [vmem:[%s524] sm:$0xff]
        %v635 = vld [vmem:[%s524 + $0x8] sm:$0xff]
        %v636 = vld [vmem:[%s524 + $0x10] sm:$0x3]
        %v637 = vmax.f32 %v631, %v634
        %v638 = vmax.f32 %v632, %v635
        %v639 = vmax.f32 %v633, %v636
        %v640 = vld [vmem:[%s527] sm:$0xff]
        %v641 = vld [vmem:[%s527 + $0x8] sm:$0xff]
        %v642 = vld [vmem:[%s527 + $0x10] sm:$0x3]
        %v643 = vmax.f32 %v637, %v640
        %v644 = vmax.f32 %v638, %v641
        %v645 = vmax.f32 %v639, %v642
        %v646 = vld [vmem:[%s530] sm:$0xff]
        %v647 = vld [vmem:[%s530 + $0x8] sm:$0xff]
        %v648 = vld [vmem:[%s530 + $0x10] sm:$0x3]
        %v649 = vmax.f32 %v643, %v646
        %v650 = vmax.f32 %v644, %v647
        %v651 = vmax.f32 %v645, %v648
        %s652 = scalar_lea.vmem [#allocation3], 72
        %653 = vst.msk [vmem:[%s652] sm:$0xff] %vm429, %v649
        %654 = vst.msk [vmem:[%s652 + $0x8] sm:$0xff] %vm429, %v650
        %655 = vst.msk [vmem:[%s652 + $0x10] sm:$0x3] %vm432, %v651
        %v656 = vld [vmem:[#allocation3] sm:$0x1]
        %v657 = vld [vmem:[#allocation3 + $0x18] sm:$0x1]
        %v658 = vld [vmem:[#allocation3 + $0x30] sm:$0x1]
        %v659 = vld [vmem:[#allocation3 + $0x48] sm:$0x1]
        %v660 = vld [vmem:[#allocation3 + $0x1] sm:$0x1]
        %v661 = vld [vmem:[#allocation3 + $0x19] sm:$0x1]
        %v662 = vld [vmem:[#allocation3 + $0x31] sm:$0x1]
        %v663 = vld [vmem:[#allocation3 + $0x49] sm:$0x1]
        %v664 = vmax.f32 %v656, %v660
        %v665 = vmax.f32 %v657, %v661
        %v666 = vmax.f32 %v658, %v662
        %v667 = vmax.f32 %v659, %v663
        %v668 = vld [vmem:[#allocation3 + $0x2] sm:$0x1]
        %v669 = vld [vmem:[#allocation3 + $0x1a] sm:$0x1]
        %v670 = vld [vmem:[#allocation3 + $0x32] sm:$0x1]
        %v671 = vld [vmem:[#allocation3 + $0x4a] sm:$0x1]
        %v672 = vmax.f32 %v664, %v668
        %v673 = vmax.f32 %v665, %v669
        %v674 = vmax.f32 %v666, %v670
        %v675 = vmax.f32 %v667, %v671
        %v676 = vld [vmem:[#allocation3 + $0x3] sm:$0x1]
        %v677 = vld [vmem:[#allocation3 + $0x1b] sm:$0x1]
        %v678 = vld [vmem:[#allocation3 + $0x33] sm:$0x1]
        %v679 = vld [vmem:[#allocation3 + $0x4b] sm:$0x1]
        %v680 = vmax.f32 %v672, %v676
        %v681 = vmax.f32 %v673, %v677
        %v682 = vmax.f32 %v674, %v678
        %v683 = vmax.f32 %v675, %v679
        %v684 = vld [vmem:[#allocation3 + $0x4] sm:$0x1]
        %v685 = vld [vmem:[#allocation3 + $0x1c] sm:$0x1]
        %v686 = vld [vmem:[#allocation3 + $0x34] sm:$0x1]
        %v687 = vld [vmem:[#allocation3 + $0x4c] sm:$0x1]
        %v688 = vmax.f32 %v680, %v684
        %v689 = vmax.f32 %v681, %v685
        %v690 = vmax.f32 %v682, %v686
        %v691 = vmax.f32 %v683, %v687
        %vm692 = vcmask 57344
        %693 = vst.msk [vmem:[%s163] sm:$0x1] %vm692, %v688
        %694 = vst.msk [vmem:[%s163 + $0x4] sm:$0x1] %vm692, %v689
        %695 = vst.msk [vmem:[%s163 + $0x8] sm:$0x1] %vm692, %v690
        %696 = vst.msk [vmem:[%s163 + $0xc] sm:$0x1] %vm692, %v691
        %v697 = vld [vmem:[#allocation3 + $0x4] sm:$0x1]
        %v698 = vld [vmem:[#allocation3 + $0x1c] sm:$0x1]
        %v699 = vld [vmem:[#allocation3 + $0x34] sm:$0x1]
        %v700 = vld [vmem:[#allocation3 + $0x4c] sm:$0x1]
        %v701 = vld [vmem:[#allocation3 + $0x5] sm:$0x1]
        %v702 = vld [vmem:[#allocation3 + $0x1d] sm:$0x1]
        %v703 = vld [vmem:[#allocation3 + $0x35] sm:$0x1]
        %v704 = vld [vmem:[#allocation3 + $0x4d] sm:$0x1]
        %v705 = vmax.f32 %v697, %v701
        %v706 = vmax.f32 %v698, %v702
        %v707 = vmax.f32 %v699, %v703
        %v708 = vmax.f32 %v700, %v704
        %v709 = vld [vmem:[#allocation3 + $0x6] sm:$0x1]
        %v710 = vld [vmem:[#allocation3 + $0x1e] sm:$0x1]
        %v711 = vld [vmem:[#allocation3 + $0x36] sm:$0x1]
        %v712 = vld [vmem:[#allocation3 + $0x4e] sm:$0x1]
        %v713 = vmax.f32 %v705, %v709
        %v714 = vmax.f32 %v706, %v710
        %v715 = vmax.f32 %v707, %v711
        %v716 = vmax.f32 %v708, %v712
        %v717 = vld [vmem:[#allocation3 + $0x7] sm:$0x1]
        %v718 = vld [vmem:[#allocation3 + $0x1f] sm:$0x1]
        %v719 = vld [vmem:[#allocation3 + $0x37] sm:$0x1]
        %v720 = vld [vmem:[#allocation3 + $0x4f] sm:$0x1]
        %v721 = vmax.f32 %v713, %v717
        %v722 = vmax.f32 %v714, %v718
        %v723 = vmax.f32 %v715, %v719
        %v724 = vmax.f32 %v716, %v720
        %v725 = vld [vmem:[#allocation3 + $0x8] sm:$0x1]
        %v726 = vld [vmem:[#allocation3 + $0x20] sm:$0x1]
        %v727 = vld [vmem:[#allocation3 + $0x38] sm:$0x1]
        %v728 = vld [vmem:[#allocation3 + $0x50] sm:$0x1]
        %v729 = vmax.f32 %v721, %v725
        %v730 = vmax.f32 %v722, %v726
        %v731 = vmax.f32 %v723, %v727
        %v732 = vmax.f32 %v724, %v728
        %733 = vst.msk [vmem:[%s163 + $0x1] sm:$0x1] %vm692, %v729
        %734 = vst.msk [vmem:[%s163 + $0x5] sm:$0x1] %vm692, %v730
        %735 = vst.msk [vmem:[%s163 + $0x9] sm:$0x1] %vm692, %v731
        %736 = vst.msk [vmem:[%s163 + $0xd] sm:$0x1] %vm692, %v732
        %v737 = vld [vmem:[#allocation3 + $0x8] sm:$0x1]
        %v738 = vld [vmem:[#allocation3 + $0x20] sm:$0x1]
        %v739 = vld [vmem:[#allocation3 + $0x38] sm:$0x1]
        %v740 = vld [vmem:[#allocation3 + $0x50] sm:$0x1]
        %v741 = vld [vmem:[#allocation3 + $0x9] sm:$0x1]
        %v742 = vld [vmem:[#allocation3 + $0x21] sm:$0x1]
        %v743 = vld [vmem:[#allocation3 + $0x39] sm:$0x1]
        %v744 = vld [vmem:[#allocation3 + $0x51] sm:$0x1]
        %v745 = vmax.f32 %v737, %v741
        %v746 = vmax.f32 %v738, %v742
        %v747 = vmax.f32 %v739, %v743
        %v748 = vmax.f32 %v740, %v744
        %v749 = vld [vmem:[#allocation3 + $0xa] sm:$0x1]
        %v750 = vld [vmem:[#allocation3 + $0x22] sm:$0x1]
        %v751 = vld [vmem:[#allocation3 + $0x3a] sm:$0x1]
        %v752 = vld [vmem:[#allocation3 + $0x52] sm:$0x1]
        %v753 = vmax.f32 %v745, %v749
        %v754 = vmax.f32 %v746, %v750
        %v755 = vmax.f32 %v747, %v751
        %v756 = vmax.f32 %v748, %v752
        %v757 = vld [vmem:[#allocation3 + $0xb] sm:$0x1]
        %v758 = vld [vmem:[#allocation3 + $0x23] sm:$0x1]
        %v759 = vld [vmem:[#allocation3 + $0x3b] sm:$0x1]
        %v760 = vld [vmem:[#allocation3 + $0x53] sm:$0x1]
        %v761 = vmax.f32 %v753, %v757
        %v762 = vmax.f32 %v754, %v758
        %v763 = vmax.f32 %v755, %v759
        %v764 = vmax.f32 %v756, %v760
        %v765 = vld [vmem:[#allocation3 + $0xc] sm:$0x1]
        %v766 = vld [vmem:[#allocation3 + $0x24] sm:$0x1]
        %v767 = vld [vmem:[#allocation3 + $0x3c] sm:$0x1]
        %v768 = vld [vmem:[#allocation3 + $0x54] sm:$0x1]
        %v769 = vmax.f32 %v761, %v765
        %v770 = vmax.f32 %v762, %v766
        %v771 = vmax.f32 %v763, %v767
        %v772 = vmax.f32 %v764, %v768
        %773 = vst.msk [vmem:[%s163 + $0x2] sm:$0x1] %vm692, %v769
        %774 = vst.msk [vmem:[%s163 + $0x6] sm:$0x1] %vm692, %v770
        %775 = vst.msk [vmem:[%s163 + $0xa] sm:$0x1] %vm692, %v771
        %776 = vst.msk [vmem:[%s163 + $0xe] sm:$0x1] %vm692, %v772
        %v777 = vld [vmem:[#allocation3 + $0xc] sm:$0x1]
        %v778 = vld [vmem:[#allocation3 + $0x24] sm:$0x1]
        %v779 = vld [vmem:[#allocation3 + $0x3c] sm:$0x1]
        %v780 = vld [vmem:[#allocation3 + $0x54] sm:$0x1]
        %v781 = vld [vmem:[#allocation3 + $0xd] sm:$0x1]
        %v782 = vld [vmem:[#allocation3 + $0x25] sm:$0x1]
        %v783 = vld [vmem:[#allocation3 + $0x3d] sm:$0x1]
        %v784 = vld [vmem:[#allocation3 + $0x55] sm:$0x1]
        %v785 = vmax.f32 %v777, %v781
        %v786 = vmax.f32 %v778, %v782
        %v787 = vmax.f32 %v779, %v783
        %v788 = vmax.f32 %v780, %v784
        %v789 = vld [vmem:[#allocation3 + $0xe] sm:$0x1]
        %v790 = vld [vmem:[#allocation3 + $0x26] sm:$0x1]
        %v791 = vld [vmem:[#allocation3 + $0x3e] sm:$0x1]
        %v792 = vld [vmem:[#allocation3 + $0x56] sm:$0x1]
        %v793 = vmax.f32 %v785, %v789
        %v794 = vmax.f32 %v786, %v790
        %v795 = vmax.f32 %v787, %v791
        %v796 = vmax.f32 %v788, %v792
        %v797 = vld [vmem:[#allocation3 + $0xf] sm:$0x1]
        %v798 = vld [vmem:[#allocation3 + $0x27] sm:$0x1]
        %v799 = vld [vmem:[#allocation3 + $0x3f] sm:$0x1]
        %v800 = vld [vmem:[#allocation3 + $0x57] sm:$0x1]
        %v801 = vmax.f32 %v793, %v797
        %v802 = vmax.f32 %v794, %v798
        %v803 = vmax.f32 %v795, %v799
        %v804 = vmax.f32 %v796, %v800
        %v805 = vld [vmem:[#allocation3 + $0x10] sm:$0x1]
        %v806 = vld [vmem:[#allocation3 + $0x28] sm:$0x1]
        %v807 = vld [vmem:[#allocation3 + $0x40] sm:$0x1]
        %v808 = vld [vmem:[#allocation3 + $0x58] sm:$0x1]
        %v809 = vmax.f32 %v801, %v805
        %v810 = vmax.f32 %v802, %v806
        %v811 = vmax.f32 %v803, %v807
        %v812 = vmax.f32 %v804, %v808
        %813 = vst.msk [vmem:[%s163 + $0x3] sm:$0x1] %vm692, %v809
        %814 = vst.msk [vmem:[%s163 + $0x7] sm:$0x1] %vm692, %v810
        %815 = vst.msk [vmem:[%s163 + $0xb] sm:$0x1] %vm692, %v811
        %816 = vst.msk [vmem:[%s163 + $0xf] sm:$0x1] %vm692, %v812
        %s817 = sand.u32 %s93, 1
        %s818 = scalar_lea.sflag [#allocation5], %s817
        %s819 = sand.u32 %s93, 1
        %s820 = smul.addr %s819, 16
        %s821 = scalar_lea.vmem [#allocation4], %s820
        // Predicated region
        $region33: #{tpu_custom_call.1} parent=31 // pred_check
          %p822 = pneg %p103
        $region34: #{tpu_custom_call.1} parent=31 // pred_check_branch
          %824 = sbr.rel (%p822) target = $region36
        $region35: #{tpu_custom_call.1} parent=31 // pred_region
          %826 = vsyncadd %s818, 0
          %s827 = smul.addr %s17, 4
          %s828 = smul.addr %s827, 4
          %s829 = scalar_lea.hbm %s3, %s828
          %s830 = sshll.u32 %s821, 4
          %s831 = int_to_ptr.vmem [resolvable:$true] %s830
          %s832 = sshll.u32 %s829, 4
          %s833 = int_to_ptr.hbm [resolvable:$true] %s832
          %838 = dma.vmem_to_hbm [thread:$0]  %s831, 256, %s833, %s818, 64, 64, 4
        $region36: #{tpu_custom_call.1} parent=31 // pred_fallthru
          _
      $region32: #{tpu_custom_call.1} parent=5 // pred_fallthru
        _
      %p839 = scmp.le.s32.totalorder 2, %s12
      // Predicated region
      $region37: #{tpu_custom_call.1} parent=5 // pred_check
        %p840 = pneg %p839
      $region38: #{tpu_custom_call.1} parent=5 // pred_check_branch
        %842 = sbr.rel (%p840) target = $region40
      $region39: #{tpu_custom_call.1} parent=5 // pred_region
        %s843 = ssub.s32 %s12, 2
        // Predicated region
        $region41: #{tpu_custom_call.1} parent=39 // pred_check
          %p844 = pneg %p109
        $region42: #{tpu_custom_call.1} parent=39 // pred_check_branch
          %846 = sbr.rel (%p844) target = $region44
        $region43: #{tpu_custom_call.1} parent=39 // pred_region
          %s847 = sand.u32 %s94, 1
          %s848 = scalar_lea.sflag [#allocation5], %s847
          %s849 = sand.u32 %s94, 1
          %s850 = smul.addr %s849, 16
          %s851 = scalar_lea.vmem [#allocation4], %s850
          %853 = dma.done %s848, 256
        $region44: #{tpu_custom_call.1} parent=39 // pred_fallthru
          _
      $region40: #{tpu_custom_call.1} parent=5 // pred_fallthru
        _
    $region6: #{tpu_custom_call.1} parent=1 // loop_footer
      %s16 = sadd.s32 1, %s12
    $region7: #{tpu_custom_call.1} parent=1 // loop_footer_branch
      %11 = sbr.rel target = $region3
    $region8: #{tpu_custom_call.1} parent=1 // loop_exit
      _
    %854 = vsyncpa [#allocation5], 1
    %s855 = scalar_lea.sflag [#allocation5], 1
    %856 = vsyncpa %s855, 1

</llo_original>
